<compile_context>
chip_gen: v7x
topology: tpu7x:2x2x1
jax: 0.10.0
libtpu: 0.0.40
codegen_flags: <defaults>
</compile_context>

<pallas_src>
import functools

import jax
import jax.numpy as jnp
from jax import lax
from jax.experimental import pallas as pl
from jax.experimental.pallas import tpu as pltpu

_MIB = 1024 * 1024
_SUBLANE = 8                      # f32 sublane granularity
_MAX_TOKEN_TILE = 1024            # tokens per grid step (upper bound)
_OUT_TILE_BUDGET = 8 * _MIB       # bytes for the double-buffered output tile
_VOCAB_SLAB = 512                 # vocab chunk inside the resident one-hot kernel
_VOCAB_CHUNK = 512                # vocab chunk streamed from HBM (middle path)
_ONEHOT_MAX_VOCAB = 32768         # beyond this the O(V)/token one-hot work loses to gather
_MAX_PREFETCH_IDS = 32768         # cap on scalar-prefetched ids per call (SMEM guard)


def _round_up(x, m):
    return ((x + m - 1) // m) * m


@functools.lru_cache(maxsize=1)
def _tpu_vmem_capacity():
    """Per-core VMEM bytes (128 MiB v5e/v6e, 64 MiB v7x); conservative fallback."""
    try:
        cap = getattr(pltpu.get_tpu_info(), "vmem_capacity_bytes", None)
        if cap:
            return int(cap)
    except Exception:
        pass
    return 64 * _MIB


def _compiler_params(semantics, vmem_need, vmem_cap):
    limit = int(min(int(vmem_cap * 0.8), max(vmem_need + 8 * _MIB, 32 * _MIB)))
    return pltpu.CompilerParams(dimension_semantics=semantics,
                                vmem_limit_bytes=limit)


def _choose_token_tile(n_tok, row_bytes, *, min_tile):
    """Tokens per grid step: as large as possible (amortize the ~0.35us/step grid
    overhead, lane-dense writeback) while 2x (double-buffered) output tiles stay
    inside _OUT_TILE_BUDGET; multiple of the sublane count; >= min_tile (the DMA
    ring depth on the gather path); and capped so there are >=2 grid steps when
    there is enough work (second TensorCore on v7x via 'parallel')."""
    t = _OUT_TILE_BUDGET // max(1, 2 * row_bytes)
    t = min(t, _MAX_TOKEN_TILE)
    t = (t // _SUBLANE) * _SUBLANE
    n_pad8 = _round_up(max(n_tok, 1), _SUBLANE)
    if n_pad8 >= 2 * min_tile:
        half = max(min_tile, ((n_pad8 // 2) // _SUBLANE) * _SUBLANE)
        t = min(t, half)
    else:
        t = min(t, n_pad8)
    return max(t, min_tile)


# --------------------------------------------------------------------------- #
# Path 1: table resident in VMEM, vocab-chunked one-hot gather on the MXU       #
# --------------------------------------------------------------------------- #
def _onehot_gather_kernel(ids_ref, w_ref, out_ref, *, vocab_size, vocab_slab):
    # ids_ref : (T, 1) int32 token-id tile (VMEM)
    # w_ref   : (V, E) embedding table, VMEM-resident (constant block)
    # out_ref : (T, E) lane/sublane-dense output tile
    ids_col = ids_ref[...]                                      # (T, 1)
    T = ids_col.shape[0]

    def slab_rows(base, width):
        # Exact 0/1 one-hot slab; HIGHEST-precision f32 MXU matmul so each gathered
        # row equals the stored table row (only one non-zero product per output).
        col = lax.broadcasted_iota(jnp.int32, (T, width), 1) + base
        onehot = (col == ids_col).astype(w_ref.dtype)
        return jnp.dot(onehot, w_ref[pl.ds(base, width), :],
                       preferred_element_type=jnp.float32,
                       precision=lax.Precision.HIGHEST).astype(out_ref.dtype)

    n_full = vocab_size // vocab_slab
    rem = vocab_size - n_full * vocab_slab

    if n_full == 0:                      # tiny vocab: single slab, direct store
        out_ref[...] = slab_rows(0, rem)
        return

    out_ref[...] = jnp.zeros_like(out_ref)

    # Vocab-chunked so the (T, slab) one-hot stays a few MiB regardless of V.
    @pl.loop(0, n_full)
    def _(s):
        base = pl.multiple_of(s * vocab_slab, vocab_slab)
        out_ref[...] += slab_rows(base, vocab_slab)

    if rem > 0:
        out_ref[...] += slab_rows(n_full * vocab_slab, rem)


def _lookup_table_resident(flat_ids, weight, *, vmem_cap):
    V, E = weight.shape
    item = weight.dtype.itemsize
    n_tok = flat_ids.shape[0]
    row_bytes = E * item
    table_bytes = V * E * item

    T = _choose_token_tile(n_tok, row_bytes, min_tile=_SUBLANE)
    n_pad = _round_up(n_tok, T)
    ids2d = jnp.pad(flat_ids, (0, n_pad - n_tok)).reshape(n_pad, 1)

    slab = min(_VOCAB_SLAB, _round_up(V, _SUBLANE))
    workspace = 3 * T * slab * 4 + 2 * T * E * 4     # iota/one-hot/partial transients
    out_bytes = 2 * T * E * item + 2 * T * 4

    def build(table_bufs):
        if table_bufs == 1:
            # Constant-index block: single-buffer it (double-buffering a block that
            # never changes only wastes VMEM -- matters most on v7x's 64 MiB).
            table_spec = pl.BlockSpec((V, E), lambda i: (0, 0),
                                      pipeline_mode=pl.Buffered(1))
        else:
            table_spec = pl.BlockSpec((V, E), lambda i: (0, 0))
        need = table_bufs * table_bytes + out_bytes + workspace
        return pl.pallas_call(
            functools.partial(_onehot_gather_kernel, vocab_size=V, vocab_slab=slab),
            out_shape=jax.ShapeDtypeStruct((n_pad, E), weight.dtype),
            grid_spec=pltpu.PrefetchScalarGridSpec(
                num_scalar_prefetch=0,
                grid=(n_pad // T,),
                in_specs=[pl.BlockSpec((T, 1), lambda i: (i, 0)),   # token-id tile
                          table_spec],                              # whole table
                out_specs=pl.BlockSpec((T, E), lambda i: (i, 0)),
            ),
            compiler_params=_compiler_params(("parallel",), need, vmem_cap),
        )(ids2d, weight)

    try:
        out = build(table_bufs=1)
    except Exception:
        # pl.Buffered(1) rejected on this jax version -> default double-buffered
        # table, or fall through to the streamed path if 2x the table won't fit.
        if 2 * table_bytes + out_bytes + workspace + 8 * _MIB <= int(vmem_cap * 0.8):
            out = build(table_bufs=2)
        else:
            return _lookup_vocab_streamed(flat_ids, weight, vmem_cap=vmem_cap)
    return out[:n_tok]


# --------------------------------------------------------------------------- #
# Path 2: table streamed from HBM in vocab chunks, accumulate into output block #
# --------------------------------------------------------------------------- #
def _streamed_onehot_kernel(ids_ref, w_ref, out_ref, *, vocab_chunk):
    # ids_ref : (T, 1) int32 tile (constant across the vocab axis)
    # w_ref   : (Vc, E) table chunk, streamed at HBM roofline
    # out_ref : (T, E) output block, resident across the vocab axis (accumulator)
    k = pl.program_id(1)

    @pl.when(k == 0)
    def _():
        out_ref[...] = jnp.zeros_like(out_ref)

    ids_col = ids_ref[...]                                      # (T, 1)
    T = ids_col.shape[0]
    base = k * vocab_chunk
    col = lax.broadcasted_iota(jnp.int32, (T, vocab_chunk), 1) + base
    onehot = (col == ids_col).astype(w_ref.dtype)               # exact 0/1
    out_ref[...] += jnp.dot(onehot, w_ref[...],
                            preferred_element_type=jnp.float32,
                            precision=lax.Precision.HIGHEST).astype(out_ref.dtype)


def _lookup_vocab_streamed(flat_ids, weight, *, vmem_cap):
    V, E = weight.shape
    item = weight.dtype.itemsize
    n_tok = flat_ids.shape[0]
    row_bytes = E * item

    Vc = _VOCAB_CHUNK
    V_pad = _round_up(V, Vc)
    # Zero-pad the vocab axis so edge chunks never read undefined HBM rows
    # (padded rows are never selected: ids are clamped to [0, V-1]).
    w_pad = jnp.pad(weight, ((0, V_pad - V), (0, 0))) if V_pad != V else weight

    T = _choose_token_tile(n_tok, row_bytes, min_tile=_SUBLANE)
    n_pad = _round_up(n_tok, T)
    ids2d = jnp.pad(flat_ids, (0, n_pad - n_tok)).reshape(n_pad, 1)

    need = 2 * Vc * E * item + 2 * T * E * item + 2 * T * 4 + 3 * T * Vc * 4

    out = pl.pallas_call(
        functools.partial(_streamed_onehot_kernel, vocab_chunk=Vc),
        out_shape=jax.ShapeDtypeStruct((n_pad, E), weight.dtype),
        grid_spec=pltpu.PrefetchScalarGridSpec(
            num_scalar_prefetch=0,
            grid=(n_pad // T, V_pad // Vc),                 # reduction (vocab) axis last
            in_specs=[pl.BlockSpec((T, 1), lambda i, k: (i, 0)),
                      pl.BlockSpec((Vc, E), lambda i, k: (k, 0))],
            out_specs=pl.BlockSpec((T, E), lambda i, k: (i, 0)),
        ),
        compiler_params=_compiler_params(("parallel", "arbitrary"), need, vmem_cap),
    )(ids2d, w_pad)
    return out[:n_tok]


# --------------------------------------------------------------------------- #
# Path 3: per-row HBM DMAs straight into the output block (deep DMA ring)       #
# --------------------------------------------------------------------------- #
def _hbm_row_gather_kernel(ids_ref, w_hbm, out_ref, sems, *, tokens_per_tile, ring):
    # ids_ref : (n_pad,) int32 token ids, scalar-prefetched to SMEM
    # w_hbm   : (V, E) embedding table, raw HBM ref (memory_space=pl.ANY)
    # out_ref : (T, E) output tile in VMEM
    # sems    : (ring,) DMA semaphore ring
    base = pl.program_id(0) * tokens_per_tile

    def row_copy(tok, r, slot):
        # HBM row -> directly into its row of the output VMEM block.
        return pltpu.make_async_copy(
            w_hbm.at[pl.ds(tok, 1), :],
            out_ref.at[pl.ds(r, 1), :],
            sems.at[slot])

    def wait_slot(slot):
        # Dummy (1, E) descriptor: valid only because *every* copy on this
        # semaphore moves exactly one (1, E) row of the same dtype.
        pltpu.make_async_copy(
            w_hbm.at[pl.ds(0, 1), :],
            out_ref.at[pl.ds(0, 1), :],
            sems.at[slot]).wait()

    # Prologue: fill the ring (issue only, no waits).  Requires T >= ring.
    @pl.loop(0, ring)
    def _(r):
        row_copy(ids_ref[base + r], r, r).start()

    # Steady state: SMEM id read hoisted ABOVE the semaphore wait (.wait() breaks
    # sst->sld forwarding); unrolled so DMA-descriptor issue pipelines.
    def steady(r, carry):
        slot = r % ring
        tok = ids_ref[base + r]
        wait_slot(slot)
        row_copy(tok, r, slot).start()
        return carry

    lax.fori_loop(ring, tokens_per_tile, steady, 0, unroll=8)

    # Drain: exactly one outstanding copy remains per slot.
    @pl.loop(0, ring)
    def _(slot):
        wait_slot(slot)


def _lookup_hbm_gather(flat_ids, weight, *, ring, vmem_cap):
    V, E = weight.shape
    item = weight.dtype.itemsize
    row_bytes = E * item
    n_tok = flat_ids.shape[0]

    # Guard the scalar-prefetched id vector (SMEM pads to next_pow2(4N) bytes):
    # segment very long batches into separate calls.
    if n_tok > _MAX_PREFETCH_IDS:
        parts = [_lookup_hbm_gather(flat_ids[s:s + _MAX_PREFETCH_IDS], weight,
                                    ring=ring, vmem_cap=vmem_cap)
                 for s in range(0, n_tok, _MAX_PREFETCH_IDS)]
        return jnp.concatenate(parts, axis=0)

    T = _choose_token_tile(n_tok, row_bytes, min_tile=ring)   # T >= ring, mult of 8
    n_pad = _round_up(n_tok, T)
    ids_pad = jnp.pad(flat_ids, (0, n_pad - n_tok))           # pad ids -> row 0, trimmed

    need = 2 * T * E * item + 4 * n_pad

    out = pl.pallas_call(
        functools.partial(_hbm_row_gather_kernel, tokens_per_tile=T, ring=ring),
        out_shape=jax.ShapeDtypeStruct((n_pad, E), weight.dtype),
        grid_spec=pltpu.PrefetchScalarGridSpec(
            num_scalar_prefetch=1,                             # ids -> SMEM
            grid=(n_pad // T,),
            in_specs=[pl.BlockSpec(memory_space=pl.ANY)],      # table stays in HBM
            out_specs=pl.BlockSpec((T, E), lambda t, ids: (t, 0)),
            scratch_shapes=[pltpu.SemaphoreType.DMA((ring,))],
        ),
        compiler_params=_compiler_params(("parallel",), need, vmem_cap),
    )(ids_pad, weight)
    return out[:n_tok]


# --------------------------------------------------------------------------- #
# Dispatcher + module mirror                                                    #
# --------------------------------------------------------------------------- #
def embedding_lookup(ids, weight, *, path=None):
    """Pallas equivalent of nn.Embedding(V, E)(ids); ids any shape -> ids.shape + (E,).

    path: None (auto) | "resident" | "streamed" | "gather".
    """
    V, E = weight.shape
    orig_shape = tuple(ids.shape)
    # PyTorch raises on out-of-range ids; clamp so every data-dependent DMA /
    # one-hot stays in range on TPU (documented semantic divergence).
    flat_ids = jnp.clip(ids.reshape(-1).astype(jnp.int32), 0, V - 1)
    n_tok = flat_ids.shape[0]
    if n_tok == 0:
        return jnp.zeros(orig_shape + (E,), weight.dtype)

    item = weight.dtype.itemsize
    row_bytes = E * item
    table_bytes = V * E * item

    vmem_cap = _tpu_vmem_capacity()
    resident_cap = max(4 * _MIB, int(vmem_cap * 0.8) // 2)   # ~51 MiB v5e/v6e, ~25 MiB v7x
    is_small_vmem = vmem_cap <= 96 * _MIB                    # v7x-like (64 MiB / core)

    if path is None:
        if V <= _ONEHOT_MAX_VOCAB and table_bytes <= resident_cap:
            path = "resident"
        else:
            T_est = _choose_token_tile(n_tok, row_bytes, min_tile=_SUBLANE)
            stream_per_tok = _round_up(V, _VOCAB_CHUNK) * E * item / max(T_est, 1)
            # A latency-bound (row_bytes) gather is worth roughly this many streamed bytes.
            gather_equiv = max(32 * 1024 if is_small_vmem else 16 * 1024, 2 * row_bytes)
            if V <= _ONEHOT_MAX_VOCAB and stream_per_tok <= gather_equiv:
                path = "streamed"
            else:
                path = "gather"

    if path == "resident":
        out = _lookup_table_resident(flat_ids, weight, vmem_cap=vmem_cap)
    elif path == "streamed":
        out = _lookup_vocab_streamed(flat_ids, weight, vmem_cap=vmem_cap)
    elif path == "gather":
        ring = 32 if is_small_vmem else 16                   # deeper ring on v7x
        out = _lookup_hbm_gather(flat_ids, weight, ring=ring, vmem_cap=vmem_cap)
    else:
        raise ValueError(f"unknown path {path!r}")
    return out.reshape(orig_shape + (E,))


class EmbeddingLayerPallas:
    """Mirror of the PyTorch EmbeddingLayer: holds the wordvec table and produces
    `incoming.sent.embedding` for a batch of token-id sequences."""

    def __init__(self, wordvec):
        self.weight = wordvec   # (vocab_size, embedding_size), from volatile.wordvec

    def forward(self, sent_ids):
        # incoming.sent.embedding = self.embLayer(incoming.data.sent)
        return embedding_lookup(sent_ids, self.weight)
        # TODO(synk): `incoming.sent = Storage()` / `incoming.sent.embLayer = self.embLayer`
        # is namespace/module-reference bookkeeping with no tensor compute.


if __name__ == "__main__":
    # Small synthetic shapes consistent with the module's forward.
    vocab_size = 64
    embedding_size = 128   # lane-dense (multiple of 128)
    batch, seq = 2, 8

    key = jax.random.PRNGKey(0)
    k_vec, k_ids = jax.random.split(key)

    wordvec = jax.random.normal(k_vec, (vocab_size, embedding_size), dtype=jnp.float32)
    sent_ids = jax.random.randint(k_ids, (batch, seq), 0, vocab_size, dtype=jnp.int32)

    ref = jnp.take(wordvec, sent_ids, axis=0)
    layer = EmbeddingLayerPallas(wordvec)

    # Default (resident) fast path: table in VMEM, vocab-chunked one-hot MXU gather.
    emb = jax.block_until_ready(layer.forward(sent_ids))
    assert emb.shape == (batch, seq, embedding_size)
    assert emb.dtype == jnp.float32
    assert jnp.allclose(emb, ref), "resident (VMEM table) path mismatch vs reference"

    # Streamed vocab-chunk path (forced) exercises the accumulator grid.
    emb_stream = jax.block_until_ready(embedding_lookup(sent_ids, wordvec, path="streamed"))
    assert jnp.allclose(emb_stream, ref), "streamed (vocab-chunk) path mismatch vs reference"

    # HBM row-gather path (forced) exercises the manual DMA ring.
    emb_gather = jax.block_until_ready(embedding_lookup(sent_ids, wordvec, path="gather"))
    assert jnp.allclose(emb_gather, ref), "HBM row-gather path mismatch vs reference"

    print("KERNEL_OK")
</pallas_src>

<mosaic_0001>
module attributes {stable_mosaic.version = 11 : i64} {
  func.func @_onehot_gather_kernel(%arg0: i32, %arg1: memref<8x1xi32, #tpu.memory_space<vmem>>, %arg2: memref<64x128xf32, #tpu.memory_space<vmem>>, %arg3: memref<8x128xf32, #tpu.memory_space<vmem>>) attributes {dimension_semantics = [#tpu.dimension_semantics<parallel>], iteration_bounds = array<i64: 2>, scalar_prefetch = 0 : i64, scratch_operands = 0 : i64, tpu.core_type = #tpu.core_type<tc>, window_params = [{transform_indices = @transform_0, window_bounds = array<i64: 8, 1>}, {pipeline_mode = #tpu.pipeline_mode<synchronous>, transform_indices = @transform_1, window_bounds = array<i64: 64, 128>}, {transform_indices = @transform_2, window_bounds = array<i64: 8, 128>}]} {
    %c0 = arith.constant 0 : index
    %c0_0 = arith.constant 0 : index
    %0 = vector.load %arg1[%c0, %c0_0] : memref<8x1xi32, #tpu.memory_space<vmem>>, vector<8x1xi32>
    %cst = arith.constant 0.000000e+00 : f32
    %1 = vector.broadcast %cst : f32 to vector<8x128xf32>
    %c0_1 = arith.constant 0 : index
    %c0_2 = arith.constant 0 : index
    %2 = vector.load %arg3[%c0_1, %c0_2] : memref<8x128xf32, #tpu.memory_space<vmem>>, vector<8x128xf32>
    tpu.vector_store %arg3[%c0_1, %c0_2], %1 {strides = array<i32>} : memref<8x128xf32, #tpu.memory_space<vmem>>, vector<8x128xf32>,
    %c0_i32 = arith.constant 0 : i32
    %c1_i32 = arith.constant 1 : i32
    %3 = arith.muli %c0_i32, %c1_i32 : i32
    %c0_i32_3 = arith.constant 0 : i32
    %4 = arith.addi %c0_i32_3, %3 : i32
    %c64_i32 = arith.constant 64 : i32
    %5 = arith.muli %4, %c64_i32 : i32
    %6 = tpu.assume_multiple %5, 64 : i32
    %c0_4 = arith.constant 0 : index
    %c0_5 = arith.constant 0 : index
    %7 = vector.load %arg3[%c0_4, %c0_5] : memref<8x128xf32, #tpu.memory_space<vmem>>, vector<8x128xf32>
    %8 = tpu.iota {dimensions = array<i32: 1>} : vector<8x64xi32>
    %9 = vector.broadcast %6 : i32 to vector<8x64xi32>
    %10 = arith.addi %8, %9 : vector<8x64xi32>
    %11 = vector.broadcast %0 : vector<8x1xi32> to vector<8x64xi32>
    %12 = arith.cmpi eq, %10, %11 : vector<8x64xi32>
    %13 = arith.extui %12 : vector<8x64xi1> to vector<8x64xi32>
    %14 = arith.sitofp %13 : vector<8x64xi32> to vector<8x64xf32>
    %15 = arith.index_cast %6 : i32 to index
    %c0_6 = arith.constant 0 : index
    %16 = vector.load %arg2[%15, %c0_6] : memref<64x128xf32, #tpu.memory_space<vmem>>, vector<64x128xf32>
    %cst_7 = arith.constant dense<0.000000e+00> : vector<8x128xf32>
    %17 = tpu.matmul %14, %16, %cst_7 {dimension_numbers = #tpu.dot_dimension_numbers<[1], [0], [0], [1], [0, 0, 1, 1], [], []>, precision = #tpu.contract_precision<fp32>} : vector<8x64xf32>, vector<64x128xf32>, vector<8x128xf32> -> vector<8x128xf32>
    %18 = arith.addf %7, %17 : vector<8x128xf32>
    %c0_8 = arith.constant 0 : index
    %c0_9 = arith.constant 0 : index
    %19 = vector.load %arg3[%c0_8, %c0_9] : memref<8x128xf32, #tpu.memory_space<vmem>>, vector<8x128xf32>
    tpu.vector_store %arg3[%c0_8, %c0_9], %18 {strides = array<i32>} : memref<8x128xf32, #tpu.memory_space<vmem>>, vector<8x128xf32>,
    %c1_i32_10 = arith.constant 1 : i32
    return
  }
  func.func @transform_0(%arg0: i32) -> (i32, i32) {
    %c0_i32 = arith.constant 0 : i32
    %c0_i32_0 = arith.constant 0 : i32
    return %arg0, %c0_i32 : i32, i32
  }
  func.func @transform_1(%arg0: i32) -> (i32, i32) {
    %c0_i32 = arith.constant 0 : i32
    %c0_i32_0 = arith.constant 0 : i32
    %c0_i32_1 = arith.constant 0 : i32
    return %c0_i32, %c0_i32_0 : i32, i32
  }
  func.func @transform_2(%arg0: i32) -> (i32, i32) {
    %c0_i32 = arith.constant 0 : i32
    %c0_i32_0 = arith.constant 0 : i32
    return %arg0, %c0_i32 : i32, i32
  }
}

module attributes {stable_mosaic.version = 11 : i64} {
  func.func @_onehot_gather_kernel(%arg0: i32, %arg1: memref<8x1xi32, #tpu.memory_space<vmem>>, %arg2: memref<64x128xf32, #tpu.memory_space<vmem>>, %arg3: memref<8x128xf32, #tpu.memory_space<vmem>>) attributes {dimension_semantics = [#tpu.dimension_semantics<parallel>], iteration_bounds = array<i64: 2>, scalar_prefetch = 0 : i64, scratch_operands = 0 : i64, tpu.core_type = #tpu.core_type<tc>, window_params = [{transform_indices = @transform_0, window_bounds = array<i64: 8, 1>}, {pipeline_mode = #tpu.pipeline_mode<synchronous>, transform_indices = @transform_1, window_bounds = array<i64: 64, 128>}, {transform_indices = @transform_2, window_bounds = array<i64: 8, 128>}]} {
    %c0 = arith.constant 0 : index
    %c0_0 = arith.constant 0 : index
    %0 = vector.load %arg1[%c0, %c0_0] : memref<8x1xi32, #tpu.memory_space<vmem>>, vector<8x1xi32>
    %cst = arith.constant 0.000000e+00 : f32
    %1 = vector.broadcast %cst : f32 to vector<8x128xf32>
    %c0_1 = arith.constant 0 : index
    %c0_2 = arith.constant 0 : index
    %2 = vector.load %arg3[%c0_1, %c0_2] : memref<8x128xf32, #tpu.memory_space<vmem>>, vector<8x128xf32>
    tpu.vector_store %arg3[%c0_1, %c0_2], %1 {strides = array<i32>} : memref<8x128xf32, #tpu.memory_space<vmem>>, vector<8x128xf32>,
    %c0_i32 = arith.constant 0 : i32
    %c1_i32 = arith.constant 1 : i32
    %3 = arith.muli %c0_i32, %c1_i32 : i32
    %c0_i32_3 = arith.constant 0 : i32
    %4 = arith.addi %c0_i32_3, %3 : i32
    %c64_i32 = arith.constant 64 : i32
    %5 = arith.muli %4, %c64_i32 : i32
    %6 = tpu.assume_multiple %5, 64 : i32
    %c0_4 = arith.constant 0 : index
    %c0_5 = arith.constant 0 : index
    %7 = vector.load %arg3[%c0_4, %c0_5] : memref<8x128xf32, #tpu.memory_space<vmem>>, vector<8x128xf32>
    %8 = tpu.iota {dimensions = array<i32: 1>} : vector<8x64xi32>
    %9 = vector.broadcast %6 : i32 to vector<8x64xi32>
    %10 = arith.addi %8, %9 : vector<8x64xi32>
    %11 = vector.broadcast %0 : vector<8x1xi32> to vector<8x64xi32>
    %12 = arith.cmpi eq, %10, %11 : vector<8x64xi32>
    %13 = arith.extui %12 : vector<8x64xi1> to vector<8x64xi32>
    %14 = arith.sitofp %13 : vector<8x64xi32> to vector<8x64xf32>
    %15 = arith.index_cast %6 : i32 to index
    %c0_6 = arith.constant 0 : index
    %16 = vector.load %arg2[%15, %c0_6] : memref<64x128xf32, #tpu.memory_space<vmem>>, vector<64x128xf32>
    %cst_7 = arith.constant dense<0.000000e+00> : vector<8x128xf32>
    %17 = tpu.matmul %14, %16, %cst_7 {dimension_numbers = #tpu.dot_dimension_numbers<[1], [0], [0], [1], [0, 0, 1, 1], [], []>, precision = #tpu.contract_precision<fp32>} : vector<8x64xf32>, vector<64x128xf32>, vector<8x128xf32> -> vector<8x128xf32>
    %18 = arith.addf %7, %17 : vector<8x128xf32>
    %c0_8 = arith.constant 0 : index
    %c0_9 = arith.constant 0 : index
    %19 = vector.load %arg3[%c0_8, %c0_9] : memref<8x128xf32, #tpu.memory_space<vmem>>, vector<8x128xf32>
    tpu.vector_store %arg3[%c0_8, %c0_9], %18 {strides = array<i32>} : memref<8x128xf32, #tpu.memory_space<vmem>>, vector<8x128xf32>,
    %c1_i32_10 = arith.constant 1 : i32
    return
  }
  func.func @transform_0(%arg0: i32) -> (i32, i32) {
    %c0_i32 = arith.constant 0 : i32
    %c0_i32_0 = arith.constant 0 : i32
    return %arg0, %c0_i32 : i32, i32
  }
  func.func @transform_1(%arg0: i32) -> (i32, i32) {
    %c0_i32 = arith.constant 0 : i32
    %c0_i32_0 = arith.constant 0 : i32
    %c0_i32_1 = arith.constant 0 : i32
    return %c0_i32, %c0_i32_0 : i32, i32
  }
  func.func @transform_2(%arg0: i32) -> (i32, i32) {
    %c0_i32 = arith.constant 0 : i32
    %c0_i32_0 = arith.constant 0 : i32
    return %arg0, %c0_i32 : i32, i32
  }
}

</mosaic_0001>

<llo_original>
// kernel: tpu_custom_call.1
$region0: #{tpu_custom_call.1}
  #allocation0 [shape = 'u32[]', space=smem, size = 0x4, offset = 0x4, fixed_abs, tag = 'smem constant byte address 0x4 - core index']
  #allocation1 [shape = 'u32[144,128]{1,0:T(1,128)}', space=vmem, size = 0x12000, scoped, tag = 'internal scratch']
  %s0 = inlined_call_operand.vmem [shape: s32[16,1], index: 0, kind: input, shape index: {}]
  %s1 = inlined_call_operand.hbm [shape: f32[64,128], index: 1, kind: input, shape index: {}]
  %s2 = inlined_call_operand.hbm [shape: f32[16,128], index: 2, kind: output, shape index: {}]
  %s3 = sld [smem:[#allocation0]]
  $region45: #{tpu_custom_call.1} parent=0
    _
  %s5 = ssub.s32 1, %s3
  %s6 = scalar_select 0, %s5, %s3
  $region1: #{tpu_custom_call.1} parent=0
    #allocation2 [shape = 'u8[32768]{0}', space=vmem, size = 0x8000, scoped, tag = 'input window, operand 1, single buffered']
    #allocation3 [shape = 's32[2]{0}', space=sflag, size = 0x8, scoped, tag = 'scoped memory for tpu_custom_call.1']
    #allocation4 [shape = 's32[2]{0}', space=sflag, size = 0x8, scoped, tag = 'scoped memory for tpu_custom_call.1']
    #allocation5 [shape = 'u8[8192]{0}', space=vmem, size = 0x2000, scoped, tag = 'output window, operand 0']
    %7 = vsyncpa [#allocation3], 0
    %8 = vsyncpa [#allocation4], 0
    %s9 = scalar_lea.sflag [#allocation4], 1
    %10 = vsyncpa %s9, 0
    loop: start=0, step=1, limit=4
    $region2: #{tpu_custom_call.1} parent=1 // loop_pre_header
      _
    $region3: #{tpu_custom_call.1} parent=1 // loop_header
      %s12 = sphi 0, %s16
      %p13 = scmp.ge.s32.totalorder %s12, 4
      %s22 = sphi 0, %s24
      %s25 = sphi 0, %s22
      %s26 = sphi 0, %s25
      %s42 = sphi 0, %s26
      %s46 = sphi 0, %s46
      %s48 = sphi 0, %s46
      %s49 = sphi 0, %s48
      %s63 = sphi 0, %s49
      %s69 = sphi 0, %s71
      %s72 = sphi 0, %s69
      %s73 = sphi 0, %s72
      %s89 = sphi 0, %s73
    $region4: #{tpu_custom_call.1} parent=1 // loop_header_branch
      %15 = sbr.rel (%p13) target = $region8
    $region5: #{tpu_custom_call.1} parent=1 // loop_body
      %s17 = ssub.s32 %s12, 1
      %s18 = ssub.s32 %s12, 2
      %s19 = sadd.s32 %s12, 1
      %s20 = ssub.s32 %s12, %s19
      %p21 = scmp.eq.s32.totalorder %s20, 0
      %s23 = sadd.s32 %s22, 1
      %s24 = scalar_select %p21, %s22, %s23
      %p27 = pneg %p21
      %p28 = scmp.eq.s32.totalorder %s12, 1
      %p29 = por %p27, %p28
      %p30 = scmp.ne.s32.totalorder %s22, %s25
      %p31 = scmp.eq.s32.totalorder %s12, 0
      %p32 = por %p30, %p31
      %p33 = scmp.ne.s32.totalorder %s22, %s25
      %p34 = scmp.eq.s32.totalorder %s17, 1
      %p35 = por %p33, %p34
      %p36 = scmp.ne.s32.totalorder %s25, %s26
      %p37 = scmp.eq.s32.totalorder %s17, 0
      %p38 = por %p36, %p37
      %p39 = scmp.ne.s32.totalorder %s25, %s26
      %p40 = scmp.eq.s32.totalorder %s18, 1
      %p41 = por %p39, %p40
      %p43 = scmp.ne.s32.totalorder %s26, %s42
      %p44 = scmp.eq.s32.totalorder %s18, 0
      %p45 = por %p43, %p44
      %s47 = sadd.s32 %s46, 1
      %p50 = scmp.eq.s32.totalorder %s12, 1
      %p51 = scmp.ne.s32.totalorder %s46, %s48
      %p52 = scmp.eq.s32.totalorder %s12, 0
      %p53 = por %p51, %p52
      %p54 = scmp.ne.s32.totalorder %s46, %s48
      %p55 = scmp.eq.s32.totalorder %s17, 1
      %p56 = por %p54, %p55
      %p57 = scmp.ne.s32.totalorder %s48, %s49
      %p58 = scmp.eq.s32.totalorder %s17, 0
      %p59 = por %p57, %p58
      %p60 = scmp.ne.s32.totalorder %s48, %s49
      %p61 = scmp.eq.s32.totalorder %s18, 1
      %p62 = por %p60, %p61
      %p64 = scmp.ne.s32.totalorder %s49, %s63
      %p65 = scmp.eq.s32.totalorder %s18, 0
      %p66 = por %p64, %p65
      %s67 = ssub.s32 %s12, %s19
      %p68 = scmp.eq.s32.totalorder %s67, 0
      %s70 = sadd.s32 %s69, 1
      %s71 = scalar_select %p68, %s69, %s70
      %p74 = pneg %p68
      %p75 = scmp.eq.s32.totalorder %s12, 1
      %p76 = por %p74, %p75
      %p77 = scmp.ne.s32.totalorder %s69, %s72
      %p78 = scmp.eq.s32.totalorder %s12, 0
      %p79 = por %p77, %p78
      %p80 = scmp.ne.s32.totalorder %s69, %s72
      %p81 = scmp.eq.s32.totalorder %s17, 1
      %p82 = por %p80, %p81
      %p83 = scmp.ne.s32.totalorder %s72, %s73
      %p84 = scmp.eq.s32.totalorder %s17, 0
      %p85 = por %p83, %p84
      %p86 = scmp.ne.s32.totalorder %s72, %s73
      %p87 = scmp.eq.s32.totalorder %s18, 1
      %p88 = por %p86, %p87
      %p90 = scmp.ne.s32.totalorder %s73, %s89
      %p91 = scmp.eq.s32.totalorder %s18, 0
      %p92 = por %p90, %p91
      %p93 = scmp.le.s32.totalorder 1, %s12
      %p94 = scmp.lt.s32.totalorder %s12, 3
      %p95 = pnand %p93, %p94
      %p96 = pneg %p95
      // Predicated region
      $region9: #{tpu_custom_call.1} parent=5 // pred_check
        _
      $region10: #{tpu_custom_call.1} parent=5 // pred_check_branch
        %98 = sbr.rel (%p95) target = $region12
      $region11: #{tpu_custom_call.1} parent=5 // pred_region
        %s99 = ssub.s32 %s12, 1
        // Predicated region
        $region13: #{tpu_custom_call.1} parent=11 // pred_check
          %p100 = pneg %p59
        $region14: #{tpu_custom_call.1} parent=11 // pred_check_branch
          %102 = sbr.rel (%p100) target = $region16
        $region15: #{tpu_custom_call.1} parent=11 // pred_region
          %s104 = ssub.s32 1024, 1024
          %105 = vsyncadd [#allocation3], %s104
          %s106 = sshll.u32 [#allocation2], 4
          %s107 = int_to_ptr.vmem [resolvable:$true] %s106
          %112 = dma.hbm_to_vmem [thread:$0]  %s1, 1024, %s107, [#allocation3], 128, 128, 8
        $region16: #{tpu_custom_call.1} parent=11 // pred_fallthru
          _
      $region12: #{tpu_custom_call.1} parent=5 // pred_fallthru
        _
      %p113 = scmp.lt.s32.totalorder %s12, 2
      // Predicated region
      $region17: #{tpu_custom_call.1} parent=5 // pred_check
        %p114 = pneg %p113
      $region18: #{tpu_custom_call.1} parent=5 // pred_check_branch
        %116 = sbr.rel (%p114) target = $region20
      $region19: #{tpu_custom_call.1} parent=5 // pred_region
        // Predicated region
        $region21: #{tpu_custom_call.1} parent=19 // pred_check
          %p117 = pneg %p32
        $region22: #{tpu_custom_call.1} parent=19 // pred_check_branch
          %119 = sbr.rel (%p117) target = $region24
        $region23: #{tpu_custom_call.1} parent=19 // pred_region
          %p120 = scmp.lt.s32.totalorder %s12, 1
          %s121 = scalar_select %p120, %s12, 1
          %s122 = smul.addr %s121, 8
          %s123 = scalar_lea.vmem %s0, %s122
        $region24: #{tpu_custom_call.1} parent=19 // pred_fallthru
          _
      $region20: #{tpu_custom_call.1} parent=5 // pred_fallthru
        _
      %p124 = scmp.le.s32.totalorder 1, %s12
      %p125 = scmp.lt.s32.totalorder %s12, 3
      %p126 = pnand %p124, %p125
      %p127 = pneg %p126
      // Predicated region
      $region25: #{tpu_custom_call.1} parent=5 // pred_check
        _
      $region26: #{tpu_custom_call.1} parent=5 // pred_check_branch
        %129 = sbr.rel (%p126) target = $region28
      $region27: #{tpu_custom_call.1} parent=5 // pred_region
        %s130 = ssub.s32 %s12, 1
        // Predicated region
        $region29: #{tpu_custom_call.1} parent=27 // pred_check
          %p131 = pneg %p59
        $region30: #{tpu_custom_call.1} parent=27 // pred_check_branch
          %133 = sbr.rel (%p131) target = $region32
        $region31: #{tpu_custom_call.1} parent=27 // pred_region
          %134 = dma.done [#allocation3], 1024
        $region32: #{tpu_custom_call.1} parent=27 // pred_fallthru
          _
        %p135 = scmp.lt.s32.totalorder %s17, 1
        %s136 = scalar_select %p135, %s17, 1
        %s137 = smul.addr %s136, 8
        %s138 = scalar_lea.vmem %s0, %s137
        %p139 = pneg %p38
        %p140 = pneg %p35
        %p141 = pneg %p59
        %p142 = pneg %p56
        %p143 = pneg %p85
        %p144 = pneg %p82
        %s145 = sand.u32 %s72, 1
        %s146 = scalar_lea.sflag [#allocation4], %s145
        %s147 = sand.u32 %s72, 1
        %s148 = smul.addr %s147, 8
        %s149 = scalar_lea.vmem [#allocation5], %s148
        %p150 = scmp.lt.s32.totalorder %s17, 1
        %s151 = scalar_select %p150, %s17, 1
        %s152 = smul.addr %s151, 8
        %s153 = scalar_lea.vmem %s0, %s152
        %v154 = vld [vmem:[%s153] sm:$0xff]
        %155 = vst [vmem:[%s149] sm:$0xff] 0.0
        %v156 = vld [vmem:[%s149] sm:$0xff]
        %v157 = vlaneseq
        %v158 = vand.u32 %v157, 127
        %v159 = vstv 0
        %v160 = vadd.s32 %v158, %v159
        %161 = vset.pattern.permute.xlu0 0
        %162 = vperm.xlu0 %161, %v154
        %v163 = vpop.permute.xlu0 %162
        %vm164 = vcmp.eq.s32.totalorder %v160, %v163
        %v165 = vsel %vm164, 1, 0
        %v166 = vcvt.s32.f32 %v165
        %v167 = vld [vmem:[#allocation2] sm:$0xff]
        %v168 = vld [vmem:[#allocation2 + $0x8] sm:$0xff]
        %v169 = vld [vmem:[#allocation2 + $0x10] sm:$0xff]
        %v170 = vld [vmem:[#allocation2 + $0x18] sm:$0xff]
        %v171 = vld [vmem:[#allocation2 + $0x20] sm:$0xff]
        %v172 = vld [vmem:[#allocation2 + $0x28] sm:$0xff]
        %v173 = vld [vmem:[#allocation2 + $0x30] sm:$0xff]
        %v174 = vld [vmem:[#allocation2 + $0x38] sm:$0xff]
        %vm175 = vcmask 523264
        %v177 = vsel %vm175, %v166, 0
        %179 = vmatprep.subr.mxu0 0.0
        %v180 = vand.u32 %v167, 4294901760
        %181 = vmatpush1.msra.mxu0 %v180
        %182 = vmatprep.subr.mxu0 0.0
        %v183 = vand.u32 %v168, 4294901760
        %184 = vmatpush1.msra.mxu0 %v183
        %185 = vmatprep.subr.mxu0 0.0
        %v186 = vand.u32 %v169, 4294901760
        %187 = vmatpush1.msra.mxu0 %v186
        %188 = vmatprep.subr.mxu0 0.0
        %v189 = vand.u32 %v170, 4294901760
        %190 = vmatpush1.msra.mxu0 %v189
        %191 = vmatprep.subr.mxu0 0.0
        %v192 = vand.u32 %v171, 4294901760
        %193 = vmatpush1.msra.mxu0 %v192
        %194 = vmatprep.subr.mxu0 0.0
        %v195 = vand.u32 %v172, 4294901760
        %196 = vmatpush1.msra.mxu0 %v195
        %197 = vmatprep.subr.mxu0 0.0
        %v198 = vand.u32 %v173, 4294901760
        %199 = vmatpush1.msra.mxu0 %v198
        %200 = vmatprep.subr.mxu0 0.0
        %v201 = vand.u32 %v174, 4294901760
        %202 = vmatpush1.msra.mxu0 %v201
        %203 = vmatprep.subr.mxu0 0.0
        %204 = vmatpush1.msra.mxu0 0.0
        %205 = vmatprep.subr.mxu0 0.0
        %206 = vmatpush1.msra.mxu0 0.0
        %207 = vmatprep.subr.mxu0 0.0
        %208 = vmatpush1.msra.mxu0 0.0
        %209 = vmatprep.subr.mxu0 0.0
        %210 = vmatpush1.msra.mxu0 0.0
        %211 = vmatprep.subr.mxu0 0.0
        %212 = vmatpush1.msra.mxu0 0.0
        %213 = vmatprep.subr.mxu0 0.0
        %214 = vmatpush1.msra.mxu0 0.0
        %215 = vmatprep.subr.mxu0 0.0
        %216 = vmatpush1.msra.mxu0 0.0
        %217 = vmatprep.subr.mxu0 0.0
        %218 = vmatpush1.msra.mxu0 0.0
        %219 = vmatprep.subr.mxu0 0.0
        %220 = vmatpush1.msra.mxu0 0.0
        %221 = vmatprep.subr.mxu0 0.0
        %222 = vmatpush1.msra.mxu0 0.0
        %223 = vmatprep.subr.mxu0 0.0
        %224 = vmatpush1.msra.mxu0 0.0
        %225 = vmatprep.subr.mxu0 0.0
        %226 = vmatpush1.msra.mxu0 0.0
        %227 = vmatprep.subr.mxu0 0.0
        %228 = vmatpush1.msra.mxu0 0.0
        %229 = vmatprep.subr.mxu0 0.0
        %230 = vmatpush1.msra.mxu0 0.0
        %231 = vmatprep.subr.mxu0 0.0
        %232 = vmatpush1.msra.mxu0 0.0
        %233 = vmatprep.subr.mxu0 0.0
        %234 = vmatpush1.msra.mxu0 0.0
        %235 = vmatprep.subr.mxu0 0.0
        %236 = vmatpush1.msra.mxu0 0.0
        %237 = vmatprep.subr.mxu0 0.0
        %238 = vmatpush1.msra.mxu0 0.0
        %239 = vmatprep.subr.mxu0 0.0
        %240 = vmatpush1.msra.mxu0 0.0
        %241 = vmatprep.subr.mxu0 0.0
        %242 = vmatpush1.msra.mxu0 0.0
        %243 = vmatprep.subr.mxu0 0.0
        %244 = vmatpush1.msra.mxu0 0.0
        %245 = vmatprep.subr.mxu0 0.0
        %246 = vmatpush1.msra.mxu0 0.0
        %247 = vmatprep.subr.mxu0 0.0
        %248 = vmatpush1.msra.mxu0 0.0
        %249 = vmatprep.subr.mxu0 0.0
        %250 = vmatpush1.msra.mxu0 0.0
        %251 = vmatprep.mubr.f32.mxu0 0.0
        %v252 = vand.u32 %v177, 4294901760
        %v253 = vsub.f32 %v177, %v252
        %v254 = vand.u32 %v253, 4294901760
        %v255 = vsub.f32 %v253, %v254
        %v256 = vand.u32 %v255, 4294901760
        %257 = vmatmul.mubr.f32.gmra.mrb[0].mxu0 %v256
        %v258 = vpop.f32.mrb[0].mxu0
        %v259 = vadd.f32 0.0, %v258
        %v260 = vpop.f32.mrb[0].mxu0
        %261 = vdwg.mxu0
        %262 = vmatprep.subr.mxu0 0.0
        %v263 = vand.u32 %v167, 4294901760
        %v264 = vsub.f32 %v167, %v263
        %v265 = vand.u32 %v264, 4294901760
        %v266 = vsub.f32 %v264, %v265
        %v267 = vand.u32 %v266, 4294901760
        %268 = vmatpush1.msra.mxu0 %v267
        %269 = vmatprep.subr.mxu0 0.0
        %v270 = vand.u32 %v168, 4294901760
        %v271 = vsub.f32 %v168, %v270
        %v272 = vand.u32 %v271, 4294901760
        %v273 = vsub.f32 %v271, %v272
        %v274 = vand.u32 %v273, 4294901760
        %275 = vmatpush1.msra.mxu0 %v274
        %276 = vmatprep.subr.mxu0 0.0
        %v277 = vand.u32 %v169, 4294901760
        %v278 = vsub.f32 %v169, %v277
        %v279 = vand.u32 %v278, 4294901760
        %v280 = vsub.f32 %v278, %v279
        %v281 = vand.u32 %v280, 4294901760
        %282 = vmatpush1.msra.mxu0 %v281
        %283 = vmatprep.subr.mxu0 0.0
        %v284 = vand.u32 %v170, 4294901760
        %v285 = vsub.f32 %v170, %v284
        %v286 = vand.u32 %v285, 4294901760
        %v287 = vsub.f32 %v285, %v286
        %v288 = vand.u32 %v287, 4294901760
        %289 = vmatpush1.msra.mxu0 %v288
        %290 = vmatprep.subr.mxu0 0.0
        %v291 = vand.u32 %v171, 4294901760
        %v292 = vsub.f32 %v171, %v291
        %v293 = vand.u32 %v292, 4294901760
        %v294 = vsub.f32 %v292, %v293
        %v295 = vand.u32 %v294, 4294901760
        %296 = vmatpush1.msra.mxu0 %v295
        %297 = vmatprep.subr.mxu0 0.0
        %v298 = vand.u32 %v172, 4294901760
        %v299 = vsub.f32 %v172, %v298
        %v300 = vand.u32 %v299, 4294901760
        %v301 = vsub.f32 %v299, %v300
        %v302 = vand.u32 %v301, 4294901760
        %303 = vmatpush1.msra.mxu0 %v302
        %304 = vmatprep.subr.mxu0 0.0
        %v305 = vand.u32 %v173, 4294901760
        %v306 = vsub.f32 %v173, %v305
        %v307 = vand.u32 %v306, 4294901760
        %v308 = vsub.f32 %v306, %v307
        %v309 = vand.u32 %v308, 4294901760
        %310 = vmatpush1.msra.mxu0 %v309
        %311 = vmatprep.subr.mxu0 0.0
        %v312 = vand.u32 %v174, 4294901760
        %v313 = vsub.f32 %v174, %v312
        %v314 = vand.u32 %v313, 4294901760
        %v315 = vsub.f32 %v313, %v314
        %v316 = vand.u32 %v315, 4294901760
        %317 = vmatpush1.msra.mxu0 %v316
        %318 = vmatprep.subr.mxu0 0.0
        %319 = vmatpush1.msra.mxu0 0.0
        %320 = vmatprep.subr.mxu0 0.0
        %321 = vmatpush1.msra.mxu0 0.0
        %322 = vmatprep.subr.mxu0 0.0
        %323 = vmatpush1.msra.mxu0 0.0
        %324 = vmatprep.subr.mxu0 0.0
        %325 = vmatpush1.msra.mxu0 0.0
        %326 = vmatprep.subr.mxu0 0.0
        %327 = vmatpush1.msra.mxu0 0.0
        %328 = vmatprep.subr.mxu0 0.0
        %329 = vmatpush1.msra.mxu0 0.0
        %330 = vmatprep.subr.mxu0 0.0
        %331 = vmatpush1.msra.mxu0 0.0
        %332 = vmatprep.subr.mxu0 0.0
        %333 = vmatpush1.msra.mxu0 0.0
        %334 = vmatprep.subr.mxu0 0.0
        %335 = vmatpush1.msra.mxu0 0.0
        %336 = vmatprep.subr.mxu0 0.0
        %337 = vmatpush1.msra.mxu0 0.0
        %338 = vmatprep.subr.mxu0 0.0
        %339 = vmatpush1.msra.mxu0 0.0
        %340 = vmatprep.subr.mxu0 0.0
        %341 = vmatpush1.msra.mxu0 0.0
        %342 = vmatprep.subr.mxu0 0.0
        %343 = vmatpush1.msra.mxu0 0.0
        %344 = vmatprep.subr.mxu0 0.0
        %345 = vmatpush1.msra.mxu0 0.0
        %346 = vmatprep.subr.mxu0 0.0
        %347 = vmatpush1.msra.mxu0 0.0
        %348 = vmatprep.subr.mxu0 0.0
        %349 = vmatpush1.msra.mxu0 0.0
        %350 = vmatprep.subr.mxu0 0.0
        %351 = vmatpush1.msra.mxu0 0.0
        %352 = vmatprep.subr.mxu0 0.0
        %353 = vmatpush1.msra.mxu0 0.0
        %354 = vmatprep.subr.mxu0 0.0
        %355 = vmatpush1.msra.mxu0 0.0
        %356 = vmatprep.subr.mxu0 0.0
        %357 = vmatpush1.msra.mxu0 0.0
        %358 = vmatprep.subr.mxu0 0.0
        %359 = vmatpush1.msra.mxu0 0.0
        %360 = vmatprep.subr.mxu0 0.0
        %361 = vmatpush1.msra.mxu0 0.0
        %362 = vmatprep.subr.mxu0 0.0
        %363 = vmatpush1.msra.mxu0 0.0
        %364 = vmatprep.subr.mxu0 0.0
        %365 = vmatpush1.msra.mxu0 0.0
        %366 = vmatprep.mubr.f32.mxu0 0.0
        %v367 = vand.u32 %v177, 4294901760
        %368 = vmatmul.mubr.f32.gmra.mrb[0].mxu0 %v367
        %v369 = vpop.f32.mrb[0].mxu0
        %v370 = vadd.f32 %v259, %v369
        %v371 = vpop.f32.mrb[0].mxu0
        %372 = vdwg.mxu0
        %373 = vmatprep.subr.mxu0 0.0
        %v374 = vand.u32 %v167, 4294901760
        %v375 = vsub.f32 %v167, %v374
        %376 = vmatpush1.msra.mxu0 %v375
        %377 = vmatprep.subr.mxu0 0.0
        %v378 = vand.u32 %v168, 4294901760
        %v379 = vsub.f32 %v168, %v378
        %380 = vmatpush1.msra.mxu0 %v379
        %381 = vmatprep.subr.mxu0 0.0
        %v382 = vand.u32 %v169, 4294901760
        %v383 = vsub.f32 %v169, %v382
        %384 = vmatpush1.msra.mxu0 %v383
        %385 = vmatprep.subr.mxu0 0.0
        %v386 = vand.u32 %v170, 4294901760
        %v387 = vsub.f32 %v170, %v386
        %388 = vmatpush1.msra.mxu0 %v387
        %389 = vmatprep.subr.mxu0 0.0
        %v390 = vand.u32 %v171, 4294901760
        %v391 = vsub.f32 %v171, %v390
        %392 = vmatpush1.msra.mxu0 %v391
        %393 = vmatprep.subr.mxu0 0.0
        %v394 = vand.u32 %v172, 4294901760
        %v395 = vsub.f32 %v172, %v394
        %396 = vmatpush1.msra.mxu0 %v395
        %397 = vmatprep.subr.mxu0 0.0
        %v398 = vand.u32 %v173, 4294901760
        %v399 = vsub.f32 %v173, %v398
        %400 = vmatpush1.msra.mxu0 %v399
        %401 = vmatprep.subr.mxu0 0.0
        %v402 = vand.u32 %v174, 4294901760
        %v403 = vsub.f32 %v174, %v402
        %404 = vmatpush1.msra.mxu0 %v403
        %405 = vmatprep.subr.mxu0 0.0
        %406 = vmatpush1.msra.mxu0 0.0
        %407 = vmatprep.subr.mxu0 0.0
        %408 = vmatpush1.msra.mxu0 0.0
        %409 = vmatprep.subr.mxu0 0.0
        %410 = vmatpush1.msra.mxu0 0.0
        %411 = vmatprep.subr.mxu0 0.0
        %412 = vmatpush1.msra.mxu0 0.0
        %413 = vmatprep.subr.mxu0 0.0
        %414 = vmatpush1.msra.mxu0 0.0
        %415 = vmatprep.subr.mxu0 0.0
        %416 = vmatpush1.msra.mxu0 0.0
        %417 = vmatprep.subr.mxu0 0.0
        %418 = vmatpush1.msra.mxu0 0.0
        %419 = vmatprep.subr.mxu0 0.0
        %420 = vmatpush1.msra.mxu0 0.0
        %421 = vmatprep.subr.mxu0 0.0
        %422 = vmatpush1.msra.mxu0 0.0
        %423 = vmatprep.subr.mxu0 0.0
        %424 = vmatpush1.msra.mxu0 0.0
        %425 = vmatprep.subr.mxu0 0.0
        %426 = vmatpush1.msra.mxu0 0.0
        %427 = vmatprep.subr.mxu0 0.0
        %428 = vmatpush1.msra.mxu0 0.0
        %429 = vmatprep.subr.mxu0 0.0
        %430 = vmatpush1.msra.mxu0 0.0
        %431 = vmatprep.subr.mxu0 0.0
        %432 = vmatpush1.msra.mxu0 0.0
        %433 = vmatprep.subr.mxu0 0.0
        %434 = vmatpush1.msra.mxu0 0.0
        %435 = vmatprep.subr.mxu0 0.0
        %436 = vmatpush1.msra.mxu0 0.0
        %437 = vmatprep.subr.mxu0 0.0
        %438 = vmatpush1.msra.mxu0 0.0
        %439 = vmatprep.subr.mxu0 0.0
        %440 = vmatpush1.msra.mxu0 0.0
        %441 = vmatprep.subr.mxu0 0.0
        %442 = vmatpush1.msra.mxu0 0.0
        %443 = vmatprep.subr.mxu0 0.0
        %444 = vmatpush1.msra.mxu0 0.0
        %445 = vmatprep.subr.mxu0 0.0
        %446 = vmatpush1.msra.mxu0 0.0
        %447 = vmatprep.subr.mxu0 0.0
        %448 = vmatpush1.msra.mxu0 0.0
        %449 = vmatprep.subr.mxu0 0.0
        %450 = vmatpush1.msra.mxu0 0.0
        %451 = vmatprep.subr.mxu0 0.0
        %452 = vmatpush1.msra.mxu0 0.0
        %453 = vmatprep.mubr.f32.mxu0 0.0
        %v454 = vand.u32 %v177, 4294901760
        %v455 = vsub.f32 %v177, %v454
        %456 = vmatmul.mubr.f32.gmra.mrb[0].mxu0 %v455
        %v457 = vpop.f32.mrb[0].mxu0
        %v458 = vadd.f32 %v370, %v457
        %v459 = vpop.f32.mrb[0].mxu0
        %460 = vdwg.mxu0
        %461 = vmatprep.subr.mxu0 0.0
        %v462 = vand.u32 %v167, 4294901760
        %463 = vmatpush1.msra.mxu0 %v462
        %464 = vmatprep.subr.mxu0 0.0
        %v465 = vand.u32 %v168, 4294901760
        %466 = vmatpush1.msra.mxu0 %v465
        %467 = vmatprep.subr.mxu0 0.0
        %v468 = vand.u32 %v169, 4294901760
        %469 = vmatpush1.msra.mxu0 %v468
        %470 = vmatprep.subr.mxu0 0.0
        %v471 = vand.u32 %v170, 4294901760
        %472 = vmatpush1.msra.mxu0 %v471
        %473 = vmatprep.subr.mxu0 0.0
        %v474 = vand.u32 %v171, 4294901760
        %475 = vmatpush1.msra.mxu0 %v474
        %476 = vmatprep.subr.mxu0 0.0
        %v477 = vand.u32 %v172, 4294901760
        %478 = vmatpush1.msra.mxu0 %v477
        %479 = vmatprep.subr.mxu0 0.0
        %v480 = vand.u32 %v173, 4294901760
        %481 = vmatpush1.msra.mxu0 %v480
        %482 = vmatprep.subr.mxu0 0.0
        %v483 = vand.u32 %v174, 4294901760
        %484 = vmatpush1.msra.mxu0 %v483
        %485 = vmatprep.subr.mxu0 0.0
        %486 = vmatpush1.msra.mxu0 0.0
        %487 = vmatprep.subr.mxu0 0.0
        %488 = vmatpush1.msra.mxu0 0.0
        %489 = vmatprep.subr.mxu0 0.0
        %490 = vmatpush1.msra.mxu0 0.0
        %491 = vmatprep.subr.mxu0 0.0
        %492 = vmatpush1.msra.mxu0 0.0
        %493 = vmatprep.subr.mxu0 0.0
        %494 = vmatpush1.msra.mxu0 0.0
        %495 = vmatprep.subr.mxu0 0.0
        %496 = vmatpush1.msra.mxu0 0.0
        %497 = vmatprep.subr.mxu0 0.0
        %498 = vmatpush1.msra.mxu0 0.0
        %499 = vmatprep.subr.mxu0 0.0
        %500 = vmatpush1.msra.mxu0 0.0
        %501 = vmatprep.subr.mxu0 0.0
        %502 = vmatpush1.msra.mxu0 0.0
        %503 = vmatprep.subr.mxu0 0.0
        %504 = vmatpush1.msra.mxu0 0.0
        %505 = vmatprep.subr.mxu0 0.0
        %506 = vmatpush1.msra.mxu0 0.0
        %507 = vmatprep.subr.mxu0 0.0
        %508 = vmatpush1.msra.mxu0 0.0
        %509 = vmatprep.subr.mxu0 0.0
        %510 = vmatpush1.msra.mxu0 0.0
        %511 = vmatprep.subr.mxu0 0.0
        %512 = vmatpush1.msra.mxu0 0.0
        %513 = vmatprep.subr.mxu0 0.0
        %514 = vmatpush1.msra.mxu0 0.0
        %515 = vmatprep.subr.mxu0 0.0
        %516 = vmatpush1.msra.mxu0 0.0
        %517 = vmatprep.subr.mxu0 0.0
        %518 = vmatpush1.msra.mxu0 0.0
        %519 = vmatprep.subr.mxu0 0.0
        %520 = vmatpush1.msra.mxu0 0.0
        %521 = vmatprep.subr.mxu0 0.0
        %522 = vmatpush1.msra.mxu0 0.0
        %523 = vmatprep.subr.mxu0 0.0
        %524 = vmatpush1.msra.mxu0 0.0
        %525 = vmatprep.subr.mxu0 0.0
        %526 = vmatpush1.msra.mxu0 0.0
        %527 = vmatprep.subr.mxu0 0.0
        %528 = vmatpush1.msra.mxu0 0.0
        %529 = vmatprep.subr.mxu0 0.0
        %530 = vmatpush1.msra.mxu0 0.0
        %531 = vmatprep.subr.mxu0 0.0
        %532 = vmatpush1.msra.mxu0 0.0
        %533 = vmatprep.mubr.f32.mxu0 0.0
        %v534 = vand.u32 %v177, 4294901760
        %v535 = vsub.f32 %v177, %v534
        %v536 = vand.u32 %v535, 4294901760
        %537 = vmatmul.mubr.f32.gmra.mrb[0].mxu0 %v536
        %v538 = vpop.f32.mrb[0].mxu0
        %v539 = vadd.f32 %v458, %v538
        %v540 = vpop.f32.mrb[0].mxu0
        %541 = vdwg.mxu0
        %542 = vmatprep.subr.mxu0 0.0
        %v543 = vand.u32 %v167, 4294901760
        %v544 = vsub.f32 %v167, %v543
        %v545 = vand.u32 %v544, 4294901760
        %546 = vmatpush1.msra.mxu0 %v545
        %547 = vmatprep.subr.mxu0 0.0
        %v548 = vand.u32 %v168, 4294901760
        %v549 = vsub.f32 %v168, %v548
        %v550 = vand.u32 %v549, 4294901760
        %551 = vmatpush1.msra.mxu0 %v550
        %552 = vmatprep.subr.mxu0 0.0
        %v553 = vand.u32 %v169, 4294901760
        %v554 = vsub.f32 %v169, %v553
        %v555 = vand.u32 %v554, 4294901760
        %556 = vmatpush1.msra.mxu0 %v555
        %557 = vmatprep.subr.mxu0 0.0
        %v558 = vand.u32 %v170, 4294901760
        %v559 = vsub.f32 %v170, %v558
        %v560 = vand.u32 %v559, 4294901760
        %561 = vmatpush1.msra.mxu0 %v560
        %562 = vmatprep.subr.mxu0 0.0
        %v563 = vand.u32 %v171, 4294901760
        %v564 = vsub.f32 %v171, %v563
        %v565 = vand.u32 %v564, 4294901760
        %566 = vmatpush1.msra.mxu0 %v565
        %567 = vmatprep.subr.mxu0 0.0
        %v568 = vand.u32 %v172, 4294901760
        %v569 = vsub.f32 %v172, %v568
        %v570 = vand.u32 %v569, 4294901760
        %571 = vmatpush1.msra.mxu0 %v570
        %572 = vmatprep.subr.mxu0 0.0
        %v573 = vand.u32 %v173, 4294901760
        %v574 = vsub.f32 %v173, %v573
        %v575 = vand.u32 %v574, 4294901760
        %576 = vmatpush1.msra.mxu0 %v575
        %577 = vmatprep.subr.mxu0 0.0
        %v578 = vand.u32 %v174, 4294901760
        %v579 = vsub.f32 %v174, %v578
        %v580 = vand.u32 %v579, 4294901760
        %581 = vmatpush1.msra.mxu0 %v580
        %582 = vmatprep.subr.mxu0 0.0
        %583 = vmatpush1.msra.mxu0 0.0
        %584 = vmatprep.subr.mxu0 0.0
        %585 = vmatpush1.msra.mxu0 0.0
        %586 = vmatprep.subr.mxu0 0.0
        %587 = vmatpush1.msra.mxu0 0.0
        %588 = vmatprep.subr.mxu0 0.0
        %589 = vmatpush1.msra.mxu0 0.0
        %590 = vmatprep.subr.mxu0 0.0
        %591 = vmatpush1.msra.mxu0 0.0
        %592 = vmatprep.subr.mxu0 0.0
        %593 = vmatpush1.msra.mxu0 0.0
        %594 = vmatprep.subr.mxu0 0.0
        %595 = vmatpush1.msra.mxu0 0.0
        %596 = vmatprep.subr.mxu0 0.0
        %597 = vmatpush1.msra.mxu0 0.0
        %598 = vmatprep.subr.mxu0 0.0
        %599 = vmatpush1.msra.mxu0 0.0
        %600 = vmatprep.subr.mxu0 0.0
        %601 = vmatpush1.msra.mxu0 0.0
        %602 = vmatprep.subr.mxu0 0.0
        %603 = vmatpush1.msra.mxu0 0.0
        %604 = vmatprep.subr.mxu0 0.0
        %605 = vmatpush1.msra.mxu0 0.0
        %606 = vmatprep.subr.mxu0 0.0
        %607 = vmatpush1.msra.mxu0 0.0
        %608 = vmatprep.subr.mxu0 0.0
        %609 = vmatpush1.msra.mxu0 0.0
        %610 = vmatprep.subr.mxu0 0.0
        %611 = vmatpush1.msra.mxu0 0.0
        %612 = vmatprep.subr.mxu0 0.0
        %613 = vmatpush1.msra.mxu0 0.0
        %614 = vmatprep.subr.mxu0 0.0
        %615 = vmatpush1.msra.mxu0 0.0
        %616 = vmatprep.subr.mxu0 0.0
        %617 = vmatpush1.msra.mxu0 0.0
        %618 = vmatprep.subr.mxu0 0.0
        %619 = vmatpush1.msra.mxu0 0.0
        %620 = vmatprep.subr.mxu0 0.0
        %621 = vmatpush1.msra.mxu0 0.0
        %622 = vmatprep.subr.mxu0 0.0
        %623 = vmatpush1.msra.mxu0 0.0
        %624 = vmatprep.subr.mxu0 0.0
        %625 = vmatpush1.msra.mxu0 0.0
        %626 = vmatprep.subr.mxu0 0.0
        %627 = vmatpush1.msra.mxu0 0.0
        %628 = vmatprep.subr.mxu0 0.0
        %629 = vmatpush1.msra.mxu0 0.0
        %630 = vmatprep.mubr.f32.mxu0 0.0
        %v631 = vand.u32 %v177, 4294901760
        %632 = vmatmul.mubr.f32.gmra.mrb[0].mxu0 %v631
        %v633 = vpop.f32.mrb[0].mxu0
        %v634 = vadd.f32 %v539, %v633
        %v635 = vpop.f32.mrb[0].mxu0
        %636 = vdwg.mxu0
        %637 = vmatprep.subr.mxu0 0.0
        %v638 = vand.u32 %v167, 4294901760
        %639 = vmatpush1.msra.mxu0 %v638
        %640 = vmatprep.subr.mxu0 0.0
        %v641 = vand.u32 %v168, 4294901760
        %642 = vmatpush1.msra.mxu0 %v641
        %643 = vmatprep.subr.mxu0 0.0
        %v644 = vand.u32 %v169, 4294901760
        %645 = vmatpush1.msra.mxu0 %v644
        %646 = vmatprep.subr.mxu0 0.0
        %v647 = vand.u32 %v170, 4294901760
        %648 = vmatpush1.msra.mxu0 %v647
        %649 = vmatprep.subr.mxu0 0.0
        %v650 = vand.u32 %v171, 4294901760
        %651 = vmatpush1.msra.mxu0 %v650
        %652 = vmatprep.subr.mxu0 0.0
        %v653 = vand.u32 %v172, 4294901760
        %654 = vmatpush1.msra.mxu0 %v653
        %655 = vmatprep.subr.mxu0 0.0
        %v656 = vand.u32 %v173, 4294901760
        %657 = vmatpush1.msra.mxu0 %v656
        %658 = vmatprep.subr.mxu0 0.0
        %v659 = vand.u32 %v174, 4294901760
        %660 = vmatpush1.msra.mxu0 %v659
        %661 = vmatprep.subr.mxu0 0.0
        %662 = vmatpush1.msra.mxu0 0.0
        %663 = vmatprep.subr.mxu0 0.0
        %664 = vmatpush1.msra.mxu0 0.0
        %665 = vmatprep.subr.mxu0 0.0
        %666 = vmatpush1.msra.mxu0 0.0
        %667 = vmatprep.subr.mxu0 0.0
        %668 = vmatpush1.msra.mxu0 0.0
        %669 = vmatprep.subr.mxu0 0.0
        %670 = vmatpush1.msra.mxu0 0.0
        %671 = vmatprep.subr.mxu0 0.0
        %672 = vmatpush1.msra.mxu0 0.0
        %673 = vmatprep.subr.mxu0 0.0
        %674 = vmatpush1.msra.mxu0 0.0
        %675 = vmatprep.subr.mxu0 0.0
        %676 = vmatpush1.msra.mxu0 0.0
        %677 = vmatprep.subr.mxu0 0.0
        %678 = vmatpush1.msra.mxu0 0.0
        %679 = vmatprep.subr.mxu0 0.0
        %680 = vmatpush1.msra.mxu0 0.0
        %681 = vmatprep.subr.mxu0 0.0
        %682 = vmatpush1.msra.mxu0 0.0
        %683 = vmatprep.subr.mxu0 0.0
        %684 = vmatpush1.msra.mxu0 0.0
        %685 = vmatprep.subr.mxu0 0.0
        %686 = vmatpush1.msra.mxu0 0.0
        %687 = vmatprep.subr.mxu0 0.0
        %688 = vmatpush1.msra.mxu0 0.0
        %689 = vmatprep.subr.mxu0 0.0
        %690 = vmatpush1.msra.mxu0 0.0
        %691 = vmatprep.subr.mxu0 0.0
        %692 = vmatpush1.msra.mxu0 0.0
        %693 = vmatprep.subr.mxu0 0.0
        %694 = vmatpush1.msra.mxu0 0.0
        %695 = vmatprep.subr.mxu0 0.0
        %696 = vmatpush1.msra.mxu0 0.0
        %697 = vmatprep.subr.mxu0 0.0
        %698 = vmatpush1.msra.mxu0 0.0
        %699 = vmatprep.subr.mxu0 0.0
        %700 = vmatpush1.msra.mxu0 0.0
        %701 = vmatprep.subr.mxu0 0.0
        %702 = vmatpush1.msra.mxu0 0.0
        %703 = vmatprep.subr.mxu0 0.0
        %704 = vmatpush1.msra.mxu0 0.0
        %705 = vmatprep.subr.mxu0 0.0
        %706 = vmatpush1.msra.mxu0 0.0
        %707 = vmatprep.subr.mxu0 0.0
        %708 = vmatpush1.msra.mxu0 0.0
        %709 = vmatprep.mubr.f32.mxu0 0.0
        %v710 = vand.u32 %v177, 4294901760
        %711 = vmatmul.mubr.f32.gmra.mrb[0].mxu0 %v710
        %v712 = vpop.f32.mrb[0].mxu0
        %v713 = vadd.f32 %v634, %v712
        %v714 = vpop.f32.mrb[0].mxu0
        %715 = vdwg.mxu0
        %v716 = vadd.f32 %v156, %v713
        %717 = vst [vmem:[%s149] sm:$0xff] %v716
        %s718 = sand.u32 %s72, 1
        %s719 = scalar_lea.sflag [#allocation4], %s718
        %s720 = sand.u32 %s72, 1
        %s721 = smul.addr %s720, 8
        %s722 = scalar_lea.vmem [#allocation5], %s721
        // Predicated region
        $region33: #{tpu_custom_call.1} parent=27 // pred_check
          %p723 = pneg %p82
        $region34: #{tpu_custom_call.1} parent=27 // pred_check_branch
          %725 = sbr.rel (%p723) target = $region36
        $region35: #{tpu_custom_call.1} parent=27 // pred_region
          %s727 = ssub.s32 128, 128
          %728 = vsyncadd %s719, %s727
          %s729 = smul.addr %s17, 128
          %s730 = scalar_lea.hbm %s2, %s729
          %s732 = sshll.u32 %s722, 4
          %s733 = int_to_ptr.vmem [resolvable:$true] %s732
          %735 = dma.vmem_to_hbm [thread:$0]  %s733, 128, %s730, %s719
        $region36: #{tpu_custom_call.1} parent=27 // pred_fallthru
          _
      $region28: #{tpu_custom_call.1} parent=5 // pred_fallthru
        _
      %p736 = scmp.le.s32.totalorder 2, %s12
      // Predicated region
      $region37: #{tpu_custom_call.1} parent=5 // pred_check
        %p737 = pneg %p736
      $region38: #{tpu_custom_call.1} parent=5 // pred_check_branch
        %739 = sbr.rel (%p737) target = $region40
      $region39: #{tpu_custom_call.1} parent=5 // pred_region
        %s740 = ssub.s32 %s12, 2
        // Predicated region
        $region41: #{tpu_custom_call.1} parent=39 // pred_check
          %p741 = pneg %p88
        $region42: #{tpu_custom_call.1} parent=39 // pred_check_branch
          %743 = sbr.rel (%p741) target = $region44
        $region43: #{tpu_custom_call.1} parent=39 // pred_region
          %s744 = sand.u32 %s73, 1
          %s745 = scalar_lea.sflag [#allocation4], %s744
          %s746 = sand.u32 %s73, 1
          %s747 = smul.addr %s746, 8
          %s748 = scalar_lea.vmem [#allocation5], %s747
          %749 = dma.done %s745, 128
        $region44: #{tpu_custom_call.1} parent=39 // pred_fallthru
          _
      $region40: #{tpu_custom_call.1} parent=5 // pred_fallthru
        _
    $region6: #{tpu_custom_call.1} parent=1 // loop_footer
      %s16 = sadd.s32 1, %s12
    $region7: #{tpu_custom_call.1} parent=1 // loop_footer_branch
      %11 = sbr.rel target = $region3
    $region8: #{tpu_custom_call.1} parent=1 // loop_exit
      _
    %750 = vsyncpa [#allocation3], 1
    %s751 = scalar_lea.sflag [#allocation3], 1
    %752 = vsyncpa %s751, 1
    %753 = vsyncpa [#allocation4], 1
    %s754 = scalar_lea.sflag [#allocation4], 1
    %755 = vsyncpa %s754, 1

// kernel: tpu_custom_call.1
$region0: #{tpu_custom_call.1}
  #allocation0 [shape = 'u32[]', space=smem, size = 0x4, offset = 0x4, fixed_abs, tag = 'smem constant byte address 0x4 - core index']
  #allocation1 [shape = 'u32[144,128]{1,0:T(1,128)}', space=vmem, size = 0x12000, scoped, tag = 'internal scratch']
  %s0 = inlined_call_operand.vmem [shape: s32[16,1], index: 0, kind: input, shape index: {}]
  %s1 = inlined_call_operand.hbm [shape: f32[64,128], index: 1, kind: input, shape index: {}]
  %s2 = inlined_call_operand.hbm [shape: f32[16,128], index: 2, kind: output, shape index: {}]
  %s3 = sld [smem:[#allocation0]]
  $region45: #{tpu_custom_call.1} parent=0
    _
  %s5 = ssub.s32 1, %s3
  %s6 = scalar_select 0, %s5, %s3
  $region1: #{tpu_custom_call.1} parent=0
    #allocation2 [shape = 'u8[32768]{0}', space=vmem, size = 0x8000, scoped, tag = 'input window, operand 1, single buffered']
    #allocation3 [shape = 's32[2]{0}', space=sflag, size = 0x8, scoped, tag = 'scoped memory for tpu_custom_call.1']
    #allocation4 [shape = 's32[2]{0}', space=sflag, size = 0x8, scoped, tag = 'scoped memory for tpu_custom_call.1']
    #allocation5 [shape = 'u8[8192]{0}', space=vmem, size = 0x2000, scoped, tag = 'output window, operand 0']
    %7 = vsyncpa [#allocation3], 0
    %8 = vsyncpa [#allocation4], 0
    %s9 = scalar_lea.sflag [#allocation4], 1
    %10 = vsyncpa %s9, 0
    loop: start=0, step=1, limit=4
    $region2: #{tpu_custom_call.1} parent=1 // loop_pre_header
      _
    $region3: #{tpu_custom_call.1} parent=1 // loop_header
      %s12 = sphi 0, %s16
      %p13 = scmp.ge.s32.totalorder %s12, 4
      %s22 = sphi 0, %s24
      %s25 = sphi 0, %s22
      %s26 = sphi 0, %s25
      %s42 = sphi 0, %s26
      %s46 = sphi 0, %s46
      %s48 = sphi 0, %s46
      %s49 = sphi 0, %s48
      %s63 = sphi 0, %s49
      %s69 = sphi 0, %s71
      %s72 = sphi 0, %s69
      %s73 = sphi 0, %s72
      %s89 = sphi 0, %s73
    $region4: #{tpu_custom_call.1} parent=1 // loop_header_branch
      %15 = sbr.rel (%p13) target = $region8
    $region5: #{tpu_custom_call.1} parent=1 // loop_body
      %s17 = ssub.s32 %s12, 1
      %s18 = ssub.s32 %s12, 2
      %s19 = sadd.s32 %s12, 1
      %s20 = ssub.s32 %s12, %s19
      %p21 = scmp.eq.s32.totalorder %s20, 0
      %s23 = sadd.s32 %s22, 1
      %s24 = scalar_select %p21, %s22, %s23
      %p27 = pneg %p21
      %p28 = scmp.eq.s32.totalorder %s12, 1
      %p29 = por %p27, %p28
      %p30 = scmp.ne.s32.totalorder %s22, %s25
      %p31 = scmp.eq.s32.totalorder %s12, 0
      %p32 = por %p30, %p31
      %p33 = scmp.ne.s32.totalorder %s22, %s25
      %p34 = scmp.eq.s32.totalorder %s17, 1
      %p35 = por %p33, %p34
      %p36 = scmp.ne.s32.totalorder %s25, %s26
      %p37 = scmp.eq.s32.totalorder %s17, 0
      %p38 = por %p36, %p37
      %p39 = scmp.ne.s32.totalorder %s25, %s26
      %p40 = scmp.eq.s32.totalorder %s18, 1
      %p41 = por %p39, %p40
      %p43 = scmp.ne.s32.totalorder %s26, %s42
      %p44 = scmp.eq.s32.totalorder %s18, 0
      %p45 = por %p43, %p44
      %s47 = sadd.s32 %s46, 1
      %p50 = scmp.eq.s32.totalorder %s12, 1
      %p51 = scmp.ne.s32.totalorder %s46, %s48
      %p52 = scmp.eq.s32.totalorder %s12, 0
      %p53 = por %p51, %p52
      %p54 = scmp.ne.s32.totalorder %s46, %s48
      %p55 = scmp.eq.s32.totalorder %s17, 1
      %p56 = por %p54, %p55
      %p57 = scmp.ne.s32.totalorder %s48, %s49
      %p58 = scmp.eq.s32.totalorder %s17, 0
      %p59 = por %p57, %p58
      %p60 = scmp.ne.s32.totalorder %s48, %s49
      %p61 = scmp.eq.s32.totalorder %s18, 1
      %p62 = por %p60, %p61
      %p64 = scmp.ne.s32.totalorder %s49, %s63
      %p65 = scmp.eq.s32.totalorder %s18, 0
      %p66 = por %p64, %p65
      %s67 = ssub.s32 %s12, %s19
      %p68 = scmp.eq.s32.totalorder %s67, 0
      %s70 = sadd.s32 %s69, 1
      %s71 = scalar_select %p68, %s69, %s70
      %p74 = pneg %p68
      %p75 = scmp.eq.s32.totalorder %s12, 1
      %p76 = por %p74, %p75
      %p77 = scmp.ne.s32.totalorder %s69, %s72
      %p78 = scmp.eq.s32.totalorder %s12, 0
      %p79 = por %p77, %p78
      %p80 = scmp.ne.s32.totalorder %s69, %s72
      %p81 = scmp.eq.s32.totalorder %s17, 1
      %p82 = por %p80, %p81
      %p83 = scmp.ne.s32.totalorder %s72, %s73
      %p84 = scmp.eq.s32.totalorder %s17, 0
      %p85 = por %p83, %p84
      %p86 = scmp.ne.s32.totalorder %s72, %s73
      %p87 = scmp.eq.s32.totalorder %s18, 1
      %p88 = por %p86, %p87
      %p90 = scmp.ne.s32.totalorder %s73, %s89
      %p91 = scmp.eq.s32.totalorder %s18, 0
      %p92 = por %p90, %p91
      %p93 = scmp.le.s32.totalorder 1, %s12
      %p94 = scmp.lt.s32.totalorder %s12, 3
      %p95 = pnand %p93, %p94
      %p96 = pneg %p95
      // Predicated region
      $region9: #{tpu_custom_call.1} parent=5 // pred_check
        _
      $region10: #{tpu_custom_call.1} parent=5 // pred_check_branch
        %98 = sbr.rel (%p95) target = $region12
      $region11: #{tpu_custom_call.1} parent=5 // pred_region
        %s99 = ssub.s32 %s12, 1
        // Predicated region
        $region13: #{tpu_custom_call.1} parent=11 // pred_check
          %p100 = pneg %p59
        $region14: #{tpu_custom_call.1} parent=11 // pred_check_branch
          %102 = sbr.rel (%p100) target = $region16
        $region15: #{tpu_custom_call.1} parent=11 // pred_region
          %s104 = ssub.s32 1024, 1024
          %105 = vsyncadd [#allocation3], %s104
          %s106 = sshll.u32 [#allocation2], 4
          %s107 = int_to_ptr.vmem [resolvable:$true] %s106
          %112 = dma.hbm_to_vmem [thread:$0]  %s1, 1024, %s107, [#allocation3], 128, 128, 8
        $region16: #{tpu_custom_call.1} parent=11 // pred_fallthru
          _
      $region12: #{tpu_custom_call.1} parent=5 // pred_fallthru
        _
      %p113 = scmp.lt.s32.totalorder %s12, 2
      // Predicated region
      $region17: #{tpu_custom_call.1} parent=5 // pred_check
        %p114 = pneg %p113
      $region18: #{tpu_custom_call.1} parent=5 // pred_check_branch
        %116 = sbr.rel (%p114) target = $region20
      $region19: #{tpu_custom_call.1} parent=5 // pred_region
        // Predicated region
        $region21: #{tpu_custom_call.1} parent=19 // pred_check
          %p117 = pneg %p32
        $region22: #{tpu_custom_call.1} parent=19 // pred_check_branch
          %119 = sbr.rel (%p117) target = $region24
        $region23: #{tpu_custom_call.1} parent=19 // pred_region
          %p120 = scmp.lt.s32.totalorder %s12, 1
          %s121 = scalar_select %p120, %s12, 1
          %s122 = smul.addr %s121, 8
          %s123 = scalar_lea.vmem %s0, %s122
        $region24: #{tpu_custom_call.1} parent=19 // pred_fallthru
          _
      $region20: #{tpu_custom_call.1} parent=5 // pred_fallthru
        _
      %p124 = scmp.le.s32.totalorder 1, %s12
      %p125 = scmp.lt.s32.totalorder %s12, 3
      %p126 = pnand %p124, %p125
      %p127 = pneg %p126
      // Predicated region
      $region25: #{tpu_custom_call.1} parent=5 // pred_check
        _
      $region26: #{tpu_custom_call.1} parent=5 // pred_check_branch
        %129 = sbr.rel (%p126) target = $region28
      $region27: #{tpu_custom_call.1} parent=5 // pred_region
        %s130 = ssub.s32 %s12, 1
        // Predicated region
        $region29: #{tpu_custom_call.1} parent=27 // pred_check
          %p131 = pneg %p59
        $region30: #{tpu_custom_call.1} parent=27 // pred_check_branch
          %133 = sbr.rel (%p131) target = $region32
        $region31: #{tpu_custom_call.1} parent=27 // pred_region
          %134 = dma.done [#allocation3], 1024
        $region32: #{tpu_custom_call.1} parent=27 // pred_fallthru
          _
        %p135 = scmp.lt.s32.totalorder %s17, 1
        %s136 = scalar_select %p135, %s17, 1
        %s137 = smul.addr %s136, 8
        %s138 = scalar_lea.vmem %s0, %s137
        %p139 = pneg %p38
        %p140 = pneg %p35
        %p141 = pneg %p59
        %p142 = pneg %p56
        %p143 = pneg %p85
        %p144 = pneg %p82
        %s145 = sand.u32 %s72, 1
        %s146 = scalar_lea.sflag [#allocation4], %s145
        %s147 = sand.u32 %s72, 1
        %s148 = smul.addr %s147, 8
        %s149 = scalar_lea.vmem [#allocation5], %s148
        %p150 = scmp.lt.s32.totalorder %s17, 1
        %s151 = scalar_select %p150, %s17, 1
        %s152 = smul.addr %s151, 8
        %s153 = scalar_lea.vmem %s0, %s152
        %v154 = vld [vmem:[%s153] sm:$0xff]
        %155 = vst [vmem:[%s149] sm:$0xff] 0.0
        %v156 = vld [vmem:[%s149] sm:$0xff]
        %v157 = vlaneseq
        %v158 = vand.u32 %v157, 127
        %v159 = vstv 0
        %v160 = vadd.s32 %v158, %v159
        %161 = vset.pattern.permute.xlu0 0
        %162 = vperm.xlu0 %161, %v154
        %v163 = vpop.permute.xlu0 %162
        %vm164 = vcmp.eq.s32.totalorder %v160, %v163
        %v165 = vsel %vm164, 1, 0
        %v166 = vcvt.s32.f32 %v165
        %v167 = vld [vmem:[#allocation2] sm:$0xff]
        %v168 = vld [vmem:[#allocation2 + $0x8] sm:$0xff]
        %v169 = vld [vmem:[#allocation2 + $0x10] sm:$0xff]
        %v170 = vld [vmem:[#allocation2 + $0x18] sm:$0xff]
        %v171 = vld [vmem:[#allocation2 + $0x20] sm:$0xff]
        %v172 = vld [vmem:[#allocation2 + $0x28] sm:$0xff]
        %v173 = vld [vmem:[#allocation2 + $0x30] sm:$0xff]
        %v174 = vld [vmem:[#allocation2 + $0x38] sm:$0xff]
        %vm175 = vcmask 523264
        %v177 = vsel %vm175, %v166, 0
        %179 = vmatprep.subr.mxu0 0.0
        %v180 = vand.u32 %v167, 4294901760
        %181 = vmatpush1.msra.mxu0 %v180
        %182 = vmatprep.subr.mxu0 0.0
        %v183 = vand.u32 %v168, 4294901760
        %184 = vmatpush1.msra.mxu0 %v183
        %185 = vmatprep.subr.mxu0 0.0
        %v186 = vand.u32 %v169, 4294901760
        %187 = vmatpush1.msra.mxu0 %v186
        %188 = vmatprep.subr.mxu0 0.0
        %v189 = vand.u32 %v170, 4294901760
        %190 = vmatpush1.msra.mxu0 %v189
        %191 = vmatprep.subr.mxu0 0.0
        %v192 = vand.u32 %v171, 4294901760
        %193 = vmatpush1.msra.mxu0 %v192
        %194 = vmatprep.subr.mxu0 0.0
        %v195 = vand.u32 %v172, 4294901760
        %196 = vmatpush1.msra.mxu0 %v195
        %197 = vmatprep.subr.mxu0 0.0
        %v198 = vand.u32 %v173, 4294901760
        %199 = vmatpush1.msra.mxu0 %v198
        %200 = vmatprep.subr.mxu0 0.0
        %v201 = vand.u32 %v174, 4294901760
        %202 = vmatpush1.msra.mxu0 %v201
        %203 = vmatprep.subr.mxu0 0.0
        %204 = vmatpush1.msra.mxu0 0.0
        %205 = vmatprep.subr.mxu0 0.0
        %206 = vmatpush1.msra.mxu0 0.0
        %207 = vmatprep.subr.mxu0 0.0
        %208 = vmatpush1.msra.mxu0 0.0
        %209 = vmatprep.subr.mxu0 0.0
        %210 = vmatpush1.msra.mxu0 0.0
        %211 = vmatprep.subr.mxu0 0.0
        %212 = vmatpush1.msra.mxu0 0.0
        %213 = vmatprep.subr.mxu0 0.0
        %214 = vmatpush1.msra.mxu0 0.0
        %215 = vmatprep.subr.mxu0 0.0
        %216 = vmatpush1.msra.mxu0 0.0
        %217 = vmatprep.subr.mxu0 0.0
        %218 = vmatpush1.msra.mxu0 0.0
        %219 = vmatprep.subr.mxu0 0.0
        %220 = vmatpush1.msra.mxu0 0.0
        %221 = vmatprep.subr.mxu0 0.0
        %222 = vmatpush1.msra.mxu0 0.0
        %223 = vmatprep.subr.mxu0 0.0
        %224 = vmatpush1.msra.mxu0 0.0
        %225 = vmatprep.subr.mxu0 0.0
        %226 = vmatpush1.msra.mxu0 0.0
        %227 = vmatprep.subr.mxu0 0.0
        %228 = vmatpush1.msra.mxu0 0.0
        %229 = vmatprep.subr.mxu0 0.0
        %230 = vmatpush1.msra.mxu0 0.0
        %231 = vmatprep.subr.mxu0 0.0
        %232 = vmatpush1.msra.mxu0 0.0
        %233 = vmatprep.subr.mxu0 0.0
        %234 = vmatpush1.msra.mxu0 0.0
        %235 = vmatprep.subr.mxu0 0.0
        %236 = vmatpush1.msra.mxu0 0.0
        %237 = vmatprep.subr.mxu0 0.0
        %238 = vmatpush1.msra.mxu0 0.0
        %239 = vmatprep.subr.mxu0 0.0
        %240 = vmatpush1.msra.mxu0 0.0
        %241 = vmatprep.subr.mxu0 0.0
        %242 = vmatpush1.msra.mxu0 0.0
        %243 = vmatprep.subr.mxu0 0.0
        %244 = vmatpush1.msra.mxu0 0.0
        %245 = vmatprep.subr.mxu0 0.0
        %246 = vmatpush1.msra.mxu0 0.0
        %247 = vmatprep.subr.mxu0 0.0
        %248 = vmatpush1.msra.mxu0 0.0
        %249 = vmatprep.subr.mxu0 0.0
        %250 = vmatpush1.msra.mxu0 0.0
        %251 = vmatprep.mubr.f32.mxu0 0.0
        %v252 = vand.u32 %v177, 4294901760
        %v253 = vsub.f32 %v177, %v252
        %v254 = vand.u32 %v253, 4294901760
        %v255 = vsub.f32 %v253, %v254
        %v256 = vand.u32 %v255, 4294901760
        %257 = vmatmul.mubr.f32.gmra.mrb[0].mxu0 %v256
        %v258 = vpop.f32.mrb[0].mxu0
        %v259 = vadd.f32 0.0, %v258
        %v260 = vpop.f32.mrb[0].mxu0
        %261 = vdwg.mxu0
        %262 = vmatprep.subr.mxu0 0.0
        %v263 = vand.u32 %v167, 4294901760
        %v264 = vsub.f32 %v167, %v263
        %v265 = vand.u32 %v264, 4294901760
        %v266 = vsub.f32 %v264, %v265
        %v267 = vand.u32 %v266, 4294901760
        %268 = vmatpush1.msra.mxu0 %v267
        %269 = vmatprep.subr.mxu0 0.0
        %v270 = vand.u32 %v168, 4294901760
        %v271 = vsub.f32 %v168, %v270
        %v272 = vand.u32 %v271, 4294901760
        %v273 = vsub.f32 %v271, %v272
        %v274 = vand.u32 %v273, 4294901760
        %275 = vmatpush1.msra.mxu0 %v274
        %276 = vmatprep.subr.mxu0 0.0
        %v277 = vand.u32 %v169, 4294901760
        %v278 = vsub.f32 %v169, %v277
        %v279 = vand.u32 %v278, 4294901760
        %v280 = vsub.f32 %v278, %v279
        %v281 = vand.u32 %v280, 4294901760
        %282 = vmatpush1.msra.mxu0 %v281
        %283 = vmatprep.subr.mxu0 0.0
        %v284 = vand.u32 %v170, 4294901760
        %v285 = vsub.f32 %v170, %v284
        %v286 = vand.u32 %v285, 4294901760
        %v287 = vsub.f32 %v285, %v286
        %v288 = vand.u32 %v287, 4294901760
        %289 = vmatpush1.msra.mxu0 %v288
        %290 = vmatprep.subr.mxu0 0.0
        %v291 = vand.u32 %v171, 4294901760
        %v292 = vsub.f32 %v171, %v291
        %v293 = vand.u32 %v292, 4294901760
        %v294 = vsub.f32 %v292, %v293
        %v295 = vand.u32 %v294, 4294901760
        %296 = vmatpush1.msra.mxu0 %v295
        %297 = vmatprep.subr.mxu0 0.0
        %v298 = vand.u32 %v172, 4294901760
        %v299 = vsub.f32 %v172, %v298
        %v300 = vand.u32 %v299, 4294901760
        %v301 = vsub.f32 %v299, %v300
        %v302 = vand.u32 %v301, 4294901760
        %303 = vmatpush1.msra.mxu0 %v302
        %304 = vmatprep.subr.mxu0 0.0
        %v305 = vand.u32 %v173, 4294901760
        %v306 = vsub.f32 %v173, %v305
        %v307 = vand.u32 %v306, 4294901760
        %v308 = vsub.f32 %v306, %v307
        %v309 = vand.u32 %v308, 4294901760
        %310 = vmatpush1.msra.mxu0 %v309
        %311 = vmatprep.subr.mxu0 0.0
        %v312 = vand.u32 %v174, 4294901760
        %v313 = vsub.f32 %v174, %v312
        %v314 = vand.u32 %v313, 4294901760
        %v315 = vsub.f32 %v313, %v314
        %v316 = vand.u32 %v315, 4294901760
        %317 = vmatpush1.msra.mxu0 %v316
        %318 = vmatprep.subr.mxu0 0.0
        %319 = vmatpush1.msra.mxu0 0.0
        %320 = vmatprep.subr.mxu0 0.0
        %321 = vmatpush1.msra.mxu0 0.0
        %322 = vmatprep.subr.mxu0 0.0
        %323 = vmatpush1.msra.mxu0 0.0
        %324 = vmatprep.subr.mxu0 0.0
        %325 = vmatpush1.msra.mxu0 0.0
        %326 = vmatprep.subr.mxu0 0.0
        %327 = vmatpush1.msra.mxu0 0.0
        %328 = vmatprep.subr.mxu0 0.0
        %329 = vmatpush1.msra.mxu0 0.0
        %330 = vmatprep.subr.mxu0 0.0
        %331 = vmatpush1.msra.mxu0 0.0
        %332 = vmatprep.subr.mxu0 0.0
        %333 = vmatpush1.msra.mxu0 0.0
        %334 = vmatprep.subr.mxu0 0.0
        %335 = vmatpush1.msra.mxu0 0.0
        %336 = vmatprep.subr.mxu0 0.0
        %337 = vmatpush1.msra.mxu0 0.0
        %338 = vmatprep.subr.mxu0 0.0
        %339 = vmatpush1.msra.mxu0 0.0
        %340 = vmatprep.subr.mxu0 0.0
        %341 = vmatpush1.msra.mxu0 0.0
        %342 = vmatprep.subr.mxu0 0.0
        %343 = vmatpush1.msra.mxu0 0.0
        %344 = vmatprep.subr.mxu0 0.0
        %345 = vmatpush1.msra.mxu0 0.0
        %346 = vmatprep.subr.mxu0 0.0
        %347 = vmatpush1.msra.mxu0 0.0
        %348 = vmatprep.subr.mxu0 0.0
        %349 = vmatpush1.msra.mxu0 0.0
        %350 = vmatprep.subr.mxu0 0.0
        %351 = vmatpush1.msra.mxu0 0.0
        %352 = vmatprep.subr.mxu0 0.0
        %353 = vmatpush1.msra.mxu0 0.0
        %354 = vmatprep.subr.mxu0 0.0
        %355 = vmatpush1.msra.mxu0 0.0
        %356 = vmatprep.subr.mxu0 0.0
        %357 = vmatpush1.msra.mxu0 0.0
        %358 = vmatprep.subr.mxu0 0.0
        %359 = vmatpush1.msra.mxu0 0.0
        %360 = vmatprep.subr.mxu0 0.0
        %361 = vmatpush1.msra.mxu0 0.0
        %362 = vmatprep.subr.mxu0 0.0
        %363 = vmatpush1.msra.mxu0 0.0
        %364 = vmatprep.subr.mxu0 0.0
        %365 = vmatpush1.msra.mxu0 0.0
        %366 = vmatprep.mubr.f32.mxu0 0.0
        %v367 = vand.u32 %v177, 4294901760
        %368 = vmatmul.mubr.f32.gmra.mrb[0].mxu0 %v367
        %v369 = vpop.f32.mrb[0].mxu0
        %v370 = vadd.f32 %v259, %v369
        %v371 = vpop.f32.mrb[0].mxu0
        %372 = vdwg.mxu0
        %373 = vmatprep.subr.mxu0 0.0
        %v374 = vand.u32 %v167, 4294901760
        %v375 = vsub.f32 %v167, %v374
        %376 = vmatpush1.msra.mxu0 %v375
        %377 = vmatprep.subr.mxu0 0.0
        %v378 = vand.u32 %v168, 4294901760
        %v379 = vsub.f32 %v168, %v378
        %380 = vmatpush1.msra.mxu0 %v379
        %381 = vmatprep.subr.mxu0 0.0
        %v382 = vand.u32 %v169, 4294901760
        %v383 = vsub.f32 %v169, %v382
        %384 = vmatpush1.msra.mxu0 %v383
        %385 = vmatprep.subr.mxu0 0.0
        %v386 = vand.u32 %v170, 4294901760
        %v387 = vsub.f32 %v170, %v386
        %388 = vmatpush1.msra.mxu0 %v387
        %389 = vmatprep.subr.mxu0 0.0
        %v390 = vand.u32 %v171, 4294901760
        %v391 = vsub.f32 %v171, %v390
        %392 = vmatpush1.msra.mxu0 %v391
        %393 = vmatprep.subr.mxu0 0.0
        %v394 = vand.u32 %v172, 4294901760
        %v395 = vsub.f32 %v172, %v394
        %396 = vmatpush1.msra.mxu0 %v395
        %397 = vmatprep.subr.mxu0 0.0
        %v398 = vand.u32 %v173, 4294901760
        %v399 = vsub.f32 %v173, %v398
        %400 = vmatpush1.msra.mxu0 %v399
        %401 = vmatprep.subr.mxu0 0.0
        %v402 = vand.u32 %v174, 4294901760
        %v403 = vsub.f32 %v174, %v402
        %404 = vmatpush1.msra.mxu0 %v403
        %405 = vmatprep.subr.mxu0 0.0
        %406 = vmatpush1.msra.mxu0 0.0
        %407 = vmatprep.subr.mxu0 0.0
        %408 = vmatpush1.msra.mxu0 0.0
        %409 = vmatprep.subr.mxu0 0.0
        %410 = vmatpush1.msra.mxu0 0.0
        %411 = vmatprep.subr.mxu0 0.0
        %412 = vmatpush1.msra.mxu0 0.0
        %413 = vmatprep.subr.mxu0 0.0
        %414 = vmatpush1.msra.mxu0 0.0
        %415 = vmatprep.subr.mxu0 0.0
        %416 = vmatpush1.msra.mxu0 0.0
        %417 = vmatprep.subr.mxu0 0.0
        %418 = vmatpush1.msra.mxu0 0.0
        %419 = vmatprep.subr.mxu0 0.0
        %420 = vmatpush1.msra.mxu0 0.0
        %421 = vmatprep.subr.mxu0 0.0
        %422 = vmatpush1.msra.mxu0 0.0
        %423 = vmatprep.subr.mxu0 0.0
        %424 = vmatpush1.msra.mxu0 0.0
        %425 = vmatprep.subr.mxu0 0.0
        %426 = vmatpush1.msra.mxu0 0.0
        %427 = vmatprep.subr.mxu0 0.0
        %428 = vmatpush1.msra.mxu0 0.0
        %429 = vmatprep.subr.mxu0 0.0
        %430 = vmatpush1.msra.mxu0 0.0
        %431 = vmatprep.subr.mxu0 0.0
        %432 = vmatpush1.msra.mxu0 0.0
        %433 = vmatprep.subr.mxu0 0.0
        %434 = vmatpush1.msra.mxu0 0.0
        %435 = vmatprep.subr.mxu0 0.0
        %436 = vmatpush1.msra.mxu0 0.0
        %437 = vmatprep.subr.mxu0 0.0
        %438 = vmatpush1.msra.mxu0 0.0
        %439 = vmatprep.subr.mxu0 0.0
        %440 = vmatpush1.msra.mxu0 0.0
        %441 = vmatprep.subr.mxu0 0.0
        %442 = vmatpush1.msra.mxu0 0.0
        %443 = vmatprep.subr.mxu0 0.0
        %444 = vmatpush1.msra.mxu0 0.0
        %445 = vmatprep.subr.mxu0 0.0
        %446 = vmatpush1.msra.mxu0 0.0
        %447 = vmatprep.subr.mxu0 0.0
        %448 = vmatpush1.msra.mxu0 0.0
        %449 = vmatprep.subr.mxu0 0.0
        %450 = vmatpush1.msra.mxu0 0.0
        %451 = vmatprep.subr.mxu0 0.0
        %452 = vmatpush1.msra.mxu0 0.0
        %453 = vmatprep.mubr.f32.mxu0 0.0
        %v454 = vand.u32 %v177, 4294901760
        %v455 = vsub.f32 %v177, %v454
        %456 = vmatmul.mubr.f32.gmra.mrb[0].mxu0 %v455
        %v457 = vpop.f32.mrb[0].mxu0
        %v458 = vadd.f32 %v370, %v457
        %v459 = vpop.f32.mrb[0].mxu0
        %460 = vdwg.mxu0
        %461 = vmatprep.subr.mxu0 0.0
        %v462 = vand.u32 %v167, 4294901760
        %463 = vmatpush1.msra.mxu0 %v462
        %464 = vmatprep.subr.mxu0 0.0
        %v465 = vand.u32 %v168, 4294901760
        %466 = vmatpush1.msra.mxu0 %v465
        %467 = vmatprep.subr.mxu0 0.0
        %v468 = vand.u32 %v169, 4294901760
        %469 = vmatpush1.msra.mxu0 %v468
        %470 = vmatprep.subr.mxu0 0.0
        %v471 = vand.u32 %v170, 4294901760
        %472 = vmatpush1.msra.mxu0 %v471
        %473 = vmatprep.subr.mxu0 0.0
        %v474 = vand.u32 %v171, 4294901760
        %475 = vmatpush1.msra.mxu0 %v474
        %476 = vmatprep.subr.mxu0 0.0
        %v477 = vand.u32 %v172, 4294901760
        %478 = vmatpush1.msra.mxu0 %v477
        %479 = vmatprep.subr.mxu0 0.0
        %v480 = vand.u32 %v173, 4294901760
        %481 = vmatpush1.msra.mxu0 %v480
        %482 = vmatprep.subr.mxu0 0.0
        %v483 = vand.u32 %v174, 4294901760
        %484 = vmatpush1.msra.mxu0 %v483
        %485 = vmatprep.subr.mxu0 0.0
        %486 = vmatpush1.msra.mxu0 0.0
        %487 = vmatprep.subr.mxu0 0.0
        %488 = vmatpush1.msra.mxu0 0.0
        %489 = vmatprep.subr.mxu0 0.0
        %490 = vmatpush1.msra.mxu0 0.0
        %491 = vmatprep.subr.mxu0 0.0
        %492 = vmatpush1.msra.mxu0 0.0
        %493 = vmatprep.subr.mxu0 0.0
        %494 = vmatpush1.msra.mxu0 0.0
        %495 = vmatprep.subr.mxu0 0.0
        %496 = vmatpush1.msra.mxu0 0.0
        %497 = vmatprep.subr.mxu0 0.0
        %498 = vmatpush1.msra.mxu0 0.0
        %499 = vmatprep.subr.mxu0 0.0
        %500 = vmatpush1.msra.mxu0 0.0
        %501 = vmatprep.subr.mxu0 0.0
        %502 = vmatpush1.msra.mxu0 0.0
        %503 = vmatprep.subr.mxu0 0.0
        %504 = vmatpush1.msra.mxu0 0.0
        %505 = vmatprep.subr.mxu0 0.0
        %506 = vmatpush1.msra.mxu0 0.0
        %507 = vmatprep.subr.mxu0 0.0
        %508 = vmatpush1.msra.mxu0 0.0
        %509 = vmatprep.subr.mxu0 0.0
        %510 = vmatpush1.msra.mxu0 0.0
        %511 = vmatprep.subr.mxu0 0.0
        %512 = vmatpush1.msra.mxu0 0.0
        %513 = vmatprep.subr.mxu0 0.0
        %514 = vmatpush1.msra.mxu0 0.0
        %515 = vmatprep.subr.mxu0 0.0
        %516 = vmatpush1.msra.mxu0 0.0
        %517 = vmatprep.subr.mxu0 0.0
        %518 = vmatpush1.msra.mxu0 0.0
        %519 = vmatprep.subr.mxu0 0.0
        %520 = vmatpush1.msra.mxu0 0.0
        %521 = vmatprep.subr.mxu0 0.0
        %522 = vmatpush1.msra.mxu0 0.0
        %523 = vmatprep.subr.mxu0 0.0
        %524 = vmatpush1.msra.mxu0 0.0
        %525 = vmatprep.subr.mxu0 0.0
        %526 = vmatpush1.msra.mxu0 0.0
        %527 = vmatprep.subr.mxu0 0.0
        %528 = vmatpush1.msra.mxu0 0.0
        %529 = vmatprep.subr.mxu0 0.0
        %530 = vmatpush1.msra.mxu0 0.0
        %531 = vmatprep.subr.mxu0 0.0
        %532 = vmatpush1.msra.mxu0 0.0
        %533 = vmatprep.mubr.f32.mxu0 0.0
        %v534 = vand.u32 %v177, 4294901760
        %v535 = vsub.f32 %v177, %v534
        %v536 = vand.u32 %v535, 4294901760
        %537 = vmatmul.mubr.f32.gmra.mrb[0].mxu0 %v536
        %v538 = vpop.f32.mrb[0].mxu0
        %v539 = vadd.f32 %v458, %v538
        %v540 = vpop.f32.mrb[0].mxu0
        %541 = vdwg.mxu0
        %542 = vmatprep.subr.mxu0 0.0
        %v543 = vand.u32 %v167, 4294901760
        %v544 = vsub.f32 %v167, %v543
        %v545 = vand.u32 %v544, 4294901760
        %546 = vmatpush1.msra.mxu0 %v545
        %547 = vmatprep.subr.mxu0 0.0
        %v548 = vand.u32 %v168, 4294901760
        %v549 = vsub.f32 %v168, %v548
        %v550 = vand.u32 %v549, 4294901760
        %551 = vmatpush1.msra.mxu0 %v550
        %552 = vmatprep.subr.mxu0 0.0
        %v553 = vand.u32 %v169, 4294901760
        %v554 = vsub.f32 %v169, %v553
        %v555 = vand.u32 %v554, 4294901760
        %556 = vmatpush1.msra.mxu0 %v555
        %557 = vmatprep.subr.mxu0 0.0
        %v558 = vand.u32 %v170, 4294901760
        %v559 = vsub.f32 %v170, %v558
        %v560 = vand.u32 %v559, 4294901760
        %561 = vmatpush1.msra.mxu0 %v560
        %562 = vmatprep.subr.mxu0 0.0
        %v563 = vand.u32 %v171, 4294901760
        %v564 = vsub.f32 %v171, %v563
        %v565 = vand.u32 %v564, 4294901760
        %566 = vmatpush1.msra.mxu0 %v565
        %567 = vmatprep.subr.mxu0 0.0
        %v568 = vand.u32 %v172, 4294901760
        %v569 = vsub.f32 %v172, %v568
        %v570 = vand.u32 %v569, 4294901760
        %571 = vmatpush1.msra.mxu0 %v570
        %572 = vmatprep.subr.mxu0 0.0
        %v573 = vand.u32 %v173, 4294901760
        %v574 = vsub.f32 %v173, %v573
        %v575 = vand.u32 %v574, 4294901760
        %576 = vmatpush1.msra.mxu0 %v575
        %577 = vmatprep.subr.mxu0 0.0
        %v578 = vand.u32 %v174, 4294901760
        %v579 = vsub.f32 %v174, %v578
        %v580 = vand.u32 %v579, 4294901760
        %581 = vmatpush1.msra.mxu0 %v580
        %582 = vmatprep.subr.mxu0 0.0
        %583 = vmatpush1.msra.mxu0 0.0
        %584 = vmatprep.subr.mxu0 0.0
        %585 = vmatpush1.msra.mxu0 0.0
        %586 = vmatprep.subr.mxu0 0.0
        %587 = vmatpush1.msra.mxu0 0.0
        %588 = vmatprep.subr.mxu0 0.0
        %589 = vmatpush1.msra.mxu0 0.0
        %590 = vmatprep.subr.mxu0 0.0
        %591 = vmatpush1.msra.mxu0 0.0
        %592 = vmatprep.subr.mxu0 0.0
        %593 = vmatpush1.msra.mxu0 0.0
        %594 = vmatprep.subr.mxu0 0.0
        %595 = vmatpush1.msra.mxu0 0.0
        %596 = vmatprep.subr.mxu0 0.0
        %597 = vmatpush1.msra.mxu0 0.0
        %598 = vmatprep.subr.mxu0 0.0
        %599 = vmatpush1.msra.mxu0 0.0
        %600 = vmatprep.subr.mxu0 0.0
        %601 = vmatpush1.msra.mxu0 0.0
        %602 = vmatprep.subr.mxu0 0.0
        %603 = vmatpush1.msra.mxu0 0.0
        %604 = vmatprep.subr.mxu0 0.0
        %605 = vmatpush1.msra.mxu0 0.0
        %606 = vmatprep.subr.mxu0 0.0
        %607 = vmatpush1.msra.mxu0 0.0
        %608 = vmatprep.subr.mxu0 0.0
        %609 = vmatpush1.msra.mxu0 0.0
        %610 = vmatprep.subr.mxu0 0.0
        %611 = vmatpush1.msra.mxu0 0.0
        %612 = vmatprep.subr.mxu0 0.0
        %613 = vmatpush1.msra.mxu0 0.0
        %614 = vmatprep.subr.mxu0 0.0
        %615 = vmatpush1.msra.mxu0 0.0
        %616 = vmatprep.subr.mxu0 0.0
        %617 = vmatpush1.msra.mxu0 0.0
        %618 = vmatprep.subr.mxu0 0.0
        %619 = vmatpush1.msra.mxu0 0.0
        %620 = vmatprep.subr.mxu0 0.0
        %621 = vmatpush1.msra.mxu0 0.0
        %622 = vmatprep.subr.mxu0 0.0
        %623 = vmatpush1.msra.mxu0 0.0
        %624 = vmatprep.subr.mxu0 0.0
        %625 = vmatpush1.msra.mxu0 0.0
        %626 = vmatprep.subr.mxu0 0.0
        %627 = vmatpush1.msra.mxu0 0.0
        %628 = vmatprep.subr.mxu0 0.0
        %629 = vmatpush1.msra.mxu0 0.0
        %630 = vmatprep.mubr.f32.mxu0 0.0
        %v631 = vand.u32 %v177, 4294901760
        %632 = vmatmul.mubr.f32.gmra.mrb[0].mxu0 %v631
        %v633 = vpop.f32.mrb[0].mxu0
        %v634 = vadd.f32 %v539, %v633
        %v635 = vpop.f32.mrb[0].mxu0
        %636 = vdwg.mxu0
        %637 = vmatprep.subr.mxu0 0.0
        %v638 = vand.u32 %v167, 4294901760
        %639 = vmatpush1.msra.mxu0 %v638
        %640 = vmatprep.subr.mxu0 0.0
        %v641 = vand.u32 %v168, 4294901760
        %642 = vmatpush1.msra.mxu0 %v641
        %643 = vmatprep.subr.mxu0 0.0
        %v644 = vand.u32 %v169, 4294901760
        %645 = vmatpush1.msra.mxu0 %v644
        %646 = vmatprep.subr.mxu0 0.0
        %v647 = vand.u32 %v170, 4294901760
        %648 = vmatpush1.msra.mxu0 %v647
        %649 = vmatprep.subr.mxu0 0.0
        %v650 = vand.u32 %v171, 4294901760
        %651 = vmatpush1.msra.mxu0 %v650
        %652 = vmatprep.subr.mxu0 0.0
        %v653 = vand.u32 %v172, 4294901760
        %654 = vmatpush1.msra.mxu0 %v653
        %655 = vmatprep.subr.mxu0 0.0
        %v656 = vand.u32 %v173, 4294901760
        %657 = vmatpush1.msra.mxu0 %v656
        %658 = vmatprep.subr.mxu0 0.0
        %v659 = vand.u32 %v174, 4294901760
        %660 = vmatpush1.msra.mxu0 %v659
        %661 = vmatprep.subr.mxu0 0.0
        %662 = vmatpush1.msra.mxu0 0.0
        %663 = vmatprep.subr.mxu0 0.0
        %664 = vmatpush1.msra.mxu0 0.0
        %665 = vmatprep.subr.mxu0 0.0
        %666 = vmatpush1.msra.mxu0 0.0
        %667 = vmatprep.subr.mxu0 0.0
        %668 = vmatpush1.msra.mxu0 0.0
        %669 = vmatprep.subr.mxu0 0.0
        %670 = vmatpush1.msra.mxu0 0.0
        %671 = vmatprep.subr.mxu0 0.0
        %672 = vmatpush1.msra.mxu0 0.0
        %673 = vmatprep.subr.mxu0 0.0
        %674 = vmatpush1.msra.mxu0 0.0
        %675 = vmatprep.subr.mxu0 0.0
        %676 = vmatpush1.msra.mxu0 0.0
        %677 = vmatprep.subr.mxu0 0.0
        %678 = vmatpush1.msra.mxu0 0.0
        %679 = vmatprep.subr.mxu0 0.0
        %680 = vmatpush1.msra.mxu0 0.0
        %681 = vmatprep.subr.mxu0 0.0
        %682 = vmatpush1.msra.mxu0 0.0
        %683 = vmatprep.subr.mxu0 0.0
        %684 = vmatpush1.msra.mxu0 0.0
        %685 = vmatprep.subr.mxu0 0.0
        %686 = vmatpush1.msra.mxu0 0.0
        %687 = vmatprep.subr.mxu0 0.0
        %688 = vmatpush1.msra.mxu0 0.0
        %689 = vmatprep.subr.mxu0 0.0
        %690 = vmatpush1.msra.mxu0 0.0
        %691 = vmatprep.subr.mxu0 0.0
        %692 = vmatpush1.msra.mxu0 0.0
        %693 = vmatprep.subr.mxu0 0.0
        %694 = vmatpush1.msra.mxu0 0.0
        %695 = vmatprep.subr.mxu0 0.0
        %696 = vmatpush1.msra.mxu0 0.0
        %697 = vmatprep.subr.mxu0 0.0
        %698 = vmatpush1.msra.mxu0 0.0
        %699 = vmatprep.subr.mxu0 0.0
        %700 = vmatpush1.msra.mxu0 0.0
        %701 = vmatprep.subr.mxu0 0.0
        %702 = vmatpush1.msra.mxu0 0.0
        %703 = vmatprep.subr.mxu0 0.0
        %704 = vmatpush1.msra.mxu0 0.0
        %705 = vmatprep.subr.mxu0 0.0
        %706 = vmatpush1.msra.mxu0 0.0
        %707 = vmatprep.subr.mxu0 0.0
        %708 = vmatpush1.msra.mxu0 0.0
        %709 = vmatprep.mubr.f32.mxu0 0.0
        %v710 = vand.u32 %v177, 4294901760
        %711 = vmatmul.mubr.f32.gmra.mrb[0].mxu0 %v710
        %v712 = vpop.f32.mrb[0].mxu0
        %v713 = vadd.f32 %v634, %v712
        %v714 = vpop.f32.mrb[0].mxu0
        %715 = vdwg.mxu0
        %v716 = vadd.f32 %v156, %v713
        %717 = vst [vmem:[%s149] sm:$0xff] %v716
        %s718 = sand.u32 %s72, 1
        %s719 = scalar_lea.sflag [#allocation4], %s718
        %s720 = sand.u32 %s72, 1
        %s721 = smul.addr %s720, 8
        %s722 = scalar_lea.vmem [#allocation5], %s721
        // Predicated region
        $region33: #{tpu_custom_call.1} parent=27 // pred_check
          %p723 = pneg %p82
        $region34: #{tpu_custom_call.1} parent=27 // pred_check_branch
          %725 = sbr.rel (%p723) target = $region36
        $region35: #{tpu_custom_call.1} parent=27 // pred_region
          %s727 = ssub.s32 128, 128
          %728 = vsyncadd %s719, %s727
          %s729 = smul.addr %s17, 128
          %s730 = scalar_lea.hbm %s2, %s729
          %s732 = sshll.u32 %s722, 4
          %s733 = int_to_ptr.vmem [resolvable:$true] %s732
          %735 = dma.vmem_to_hbm [thread:$0]  %s733, 128, %s730, %s719
        $region36: #{tpu_custom_call.1} parent=27 // pred_fallthru
          _
      $region28: #{tpu_custom_call.1} parent=5 // pred_fallthru
        _
      %p736 = scmp.le.s32.totalorder 2, %s12
      // Predicated region
      $region37: #{tpu_custom_call.1} parent=5 // pred_check
        %p737 = pneg %p736
      $region38: #{tpu_custom_call.1} parent=5 // pred_check_branch
        %739 = sbr.rel (%p737) target = $region40
      $region39: #{tpu_custom_call.1} parent=5 // pred_region
        %s740 = ssub.s32 %s12, 2
        // Predicated region
        $region41: #{tpu_custom_call.1} parent=39 // pred_check
          %p741 = pneg %p88
        $region42: #{tpu_custom_call.1} parent=39 // pred_check_branch
          %743 = sbr.rel (%p741) target = $region44
        $region43: #{tpu_custom_call.1} parent=39 // pred_region
          %s744 = sand.u32 %s73, 1
          %s745 = scalar_lea.sflag [#allocation4], %s744
          %s746 = sand.u32 %s73, 1
          %s747 = smul.addr %s746, 8
          %s748 = scalar_lea.vmem [#allocation5], %s747
          %749 = dma.done %s745, 128
        $region44: #{tpu_custom_call.1} parent=39 // pred_fallthru
          _
      $region40: #{tpu_custom_call.1} parent=5 // pred_fallthru
        _
    $region6: #{tpu_custom_call.1} parent=1 // loop_footer
      %s16 = sadd.s32 1, %s12
    $region7: #{tpu_custom_call.1} parent=1 // loop_footer_branch
      %11 = sbr.rel target = $region3
    $region8: #{tpu_custom_call.1} parent=1 // loop_exit
      _
    %750 = vsyncpa [#allocation3], 1
    %s751 = scalar_lea.sflag [#allocation3], 1
    %752 = vsyncpa %s751, 1
    %753 = vsyncpa [#allocation4], 1
    %s754 = scalar_lea.sflag [#allocation4], 1
    %755 = vsyncpa %s754, 1

</llo_original>
